<compile_context>
chip_gen: v5e
topology: v5e:2x2
jax: 0.10.0
libtpu: 0.0.40
codegen_flags: <defaults>
</compile_context>

<pallas_src>
import jax
import jax.numpy as jnp
from jax.experimental import pallas as pl
from jax.experimental.pallas import tpu as pltpu

# ---- original module sizes -------------------------------------------------
IN_FEATS = 8
HIDDEN = 100
OUT_FEATS = 4

# ---- lane / MXU aligned padded sizes ---------------------------------------
F_PAD = 128
H_PAD = 128
OUT_PAD = 128

# ---- graph batching: pack graphs into 128-row block-diagonal groups ---------
N_NODES = 8              # nodes per graph
GRAPHS_PER_GROUP = 16    # 16 * 8 = 128 rows per group
N_GROUPS = 2
N_GRAPHS = N_GROUPS * GRAPHS_PER_GROUP
M_TILE = GRAPHS_PER_GROUP * N_NODES   # 128


# ----------------------------- kernels ---------------------------------------
def _gcn_layers(h, adj_matvec, wl_ref, bl_ref, layer_refs, wo_ref, bo_ref):
    """Shared math: lift already applied to h; run 3 MPLs + output head."""
    for wh_ref, wr_ref, b_ref in layer_refs:
        # message passing: reduced[v] = sum_u A[v, u] * h[u]
        r = adj_matvec(h)
        # concat(h, r) @ W  ==  h @ Wh + r @ Wr   (two register-resident dots,
        # second one accumulates into the first -> MRB accumulate on v7x).
        acc = jnp.dot(h, wh_ref[...], preferred_element_type=jnp.float32)
        acc = acc + jnp.dot(r, wr_ref[...], preferred_element_type=jnp.float32)
        h = jnp.maximum(acc + b_ref[...], 0.0)
    y = jnp.dot(h, wo_ref[...], preferred_element_type=jnp.float32) + bo_ref[...]
    return jax.nn.sigmoid(y)


def gcn_kernel_grouped(x_ref, adj_ref,
                       wl_ref, bl_ref,
                       wh1_ref, wr1_ref, b1_ref,
                       wh2_ref, wr2_ref, b2_ref,
                       wh3_ref, wr3_ref, b3_ref,
                       wo_ref, bo_ref,
                       out_ref):
    """One 128-row group per grid step (parallel over TensorCores)."""
    x = x_ref[0]          # (M_TILE, F_PAD)
    adj = adj_ref[0]      # (M_TILE, M_TILE) block-diagonal over the group's graphs

    h = jnp.tanh(
        jnp.dot(x, wl_ref[...], preferred_element_type=jnp.float32) + bl_ref[...])

    layer_refs = ((wh1_ref, wr1_ref, b1_ref),
                  (wh2_ref, wr2_ref, b2_ref),
                  (wh3_ref, wr3_ref, b3_ref))
    adj_matvec = lambda hh: jnp.dot(adj, hh, preferred_element_type=jnp.float32)
    out_ref[0] = _gcn_layers(h, adj_matvec, wl_ref, bl_ref, layer_refs,
                             wo_ref, bo_ref)


def gcn_kernel_fused(x_ref, adj_ref,
                     wl_ref, bl_ref,
                     wh1_ref, wr1_ref, b1_ref,
                     wh2_ref, wr2_ref, b2_ref,
                     wh3_ref, wr3_ref, b3_ref,
                     wo_ref, bo_ref,
                     out_ref):
    """Single grid step (v5e / v6e): M = 256 matmul chain, per-group adj dots."""
    x = x_ref[...]        # (N_GROUPS * M_TILE, F_PAD)

    h = jnp.tanh(
        jnp.dot(x, wl_ref[...], preferred_element_type=jnp.float32) + bl_ref[...])

    def adj_matvec(hh):
        parts = [
            jnp.dot(adj_ref[g], hh[g * M_TILE:(g + 1) * M_TILE],
                    preferred_element_type=jnp.float32)
            for g in range(N_GROUPS)
        ]
        return jnp.concatenate(parts, axis=0)

    layer_refs = ((wh1_ref, wr1_ref, b1_ref),
                  (wh2_ref, wr2_ref, b2_ref),
                  (wh3_ref, wr3_ref, b3_ref))
    out_ref[...] = _gcn_layers(h, adj_matvec, wl_ref, bl_ref, layer_refs,
                               wo_ref, bo_ref)


# ----------------------------- wrappers --------------------------------------
def _weight_args(padded):
    return (padded["wl"], padded["bl"],
            padded["wh1"], padded["wr1"], padded["b1"],
            padded["wh2"], padded["wr2"], padded["b2"],
            padded["wh3"], padded["wr3"], padded["b3"],
            padded["wo"], padded["bo"])


def _weight_specs():
    bcast2 = lambda i: (0, 0)   # same block every grid step
    specs = [pl.BlockSpec((F_PAD, H_PAD), bcast2),
             pl.BlockSpec((1, H_PAD), bcast2)]
    for _ in range(3):
        specs += [pl.BlockSpec((H_PAD, H_PAD), bcast2),
                  pl.BlockSpec((H_PAD, H_PAD), bcast2),
                  pl.BlockSpec((1, H_PAD), bcast2)]
    specs += [pl.BlockSpec((H_PAD, OUT_PAD), bcast2),
              pl.BlockSpec((1, OUT_PAD), bcast2)]
    return specs


def gcn_forward_parallel(x_grp, adj_grp, padded):
    """x_grp: (N_GROUPS, M_TILE, F_PAD), adj_grp: (N_GROUPS, M_TILE, M_TILE)."""
    grp3 = lambda i: (i, 0, 0)
    in_specs = [pl.BlockSpec((1, M_TILE, F_PAD), grp3),
                pl.BlockSpec((1, M_TILE, M_TILE), grp3)] + _weight_specs()
    return pl.pallas_call(
        gcn_kernel_grouped,
        out_shape=jax.ShapeDtypeStruct((N_GROUPS, M_TILE, OUT_PAD), jnp.float32),
        grid=(N_GROUPS,),
        in_specs=in_specs,
        out_specs=pl.BlockSpec((1, M_TILE, OUT_PAD), grp3),
        compiler_params=pltpu.CompilerParams(
            dimension_semantics=("parallel",)),
    )(x_grp, adj_grp, *_weight_args(padded))


def gcn_forward_single(x_flat, adj_grp, padded):
    """x_flat: (N_GROUPS*M_TILE, F_PAD); one grid step, M=256 matmul chain."""
    in_specs = [pl.BlockSpec((N_GROUPS * M_TILE, F_PAD), lambda i: (0, 0)),
                pl.BlockSpec((N_GROUPS, M_TILE, M_TILE), lambda i: (0, 0, 0))
                ] + _weight_specs()
    return pl.pallas_call(
        gcn_kernel_fused,
        out_shape=jax.ShapeDtypeStruct((N_GROUPS * M_TILE, OUT_PAD), jnp.float32),
        grid=(1,),
        in_specs=in_specs,
        out_specs=pl.BlockSpec((N_GROUPS * M_TILE, OUT_PAD), lambda i: (0, 0)),
        compiler_params=pltpu.CompilerParams(
            dimension_semantics=("arbitrary",)),
    )(x_flat, adj_grp, *_weight_args(padded))


def _single_tensorcore_chip():
    """True on chips with one TensorCore (v5e, v6e); default False (parallel)."""
    try:
        kind = jax.devices()[0].device_kind.lower()
    except Exception:
        return False
    return any(tag in kind for tag in ("v5e", "v5 lite", "v6e", "v6 lite"))


# ----------------------------- parameters -----------------------------------
def init_linear(key, fan_in, fan_out):
    """nn.Linear-style init (uniform +/- 1/sqrt(fan_in)); weight in (in, out)."""
    kw, kb = jax.random.split(key)
    bound = 1.0 / jnp.sqrt(fan_in)
    w = jax.random.uniform(kw, (fan_in, fan_out), jnp.float32, -bound, bound)
    b = jax.random.uniform(kb, (1, fan_out), jnp.float32, -bound, bound)
    return w, b


def build_params(key):
    keys = jax.random.split(key, 5)
    wl, bl = init_linear(keys[0], IN_FEATS, HIDDEN)
    p = {"wl": wl, "bl": bl}
    for i, k in enumerate(keys[1:4], start=1):
        w, b = init_linear(k, 2 * HIDDEN, HIDDEN)   # Linear(2*hidden, hidden)
        p[f"w{i}"] = w
        p[f"b{i}"] = b
    wo, bo = init_linear(keys[4], HIDDEN, OUT_FEATS)
    p["wo"] = wo
    p["bo"] = bo
    return p


def pad_params(p):
    """Zero-pad to lane/MXU aligned shapes (exact: pads are zero); split the
    Linear(2*hidden, hidden) weight into its h-part and reduced-part halves."""
    pad2 = lambda a, r, c: jnp.pad(a, ((0, r - a.shape[0]), (0, c - a.shape[1])))
    out = {
        "wl": pad2(p["wl"], F_PAD, H_PAD),
        "bl": pad2(p["bl"], 1, H_PAD),
        "wo": pad2(p["wo"], H_PAD, OUT_PAD),
        "bo": pad2(p["bo"], 1, OUT_PAD),
    }
    for i in (1, 2, 3):
        w = p[f"w{i}"]                                   # (2*HIDDEN, HIDDEN)
        out[f"wh{i}"] = pad2(w[:HIDDEN], H_PAD, H_PAD)   # multiplies h
        out[f"wr{i}"] = pad2(w[HIDDEN:], H_PAD, H_PAD)   # multiplies reduced
        out[f"b{i}"] = pad2(p[f"b{i}"], 1, H_PAD)
    return out


# ----------------------------- reference ------------------------------------
def reference_forward(x, adj, p):
    """Plain-JAX reference on the unpadded, per-graph data."""
    h = jnp.tanh(x @ p["wl"] + p["bl"])
    for i in (1, 2, 3):
        r = jnp.einsum("bij,bjh->bih", adj, h)
        hr = jnp.concatenate([h, r], axis=-1)
        h = jax.nn.relu(hr @ p[f"w{i}"] + p[f"b{i}"])
    return jax.nn.sigmoid(h @ p["wo"] + p["bo"])


# ----------------------------- main -----------------------------------------
if __name__ == "__main__":
    key = jax.random.PRNGKey(0)
    k_x, k_adj, k_params = jax.random.split(key, 3)

    # node features for 32 small graphs
    x = jax.random.normal(k_x, (N_GRAPHS, N_NODES, IN_FEATS), jnp.float32)

    # dense weighted adjacency per graph: A[b, dst, src] (0 => no edge)
    k_w, k_m = jax.random.split(k_adj)
    weights = jax.random.uniform(k_w, (N_GRAPHS, N_NODES, N_NODES), jnp.float32)
    mask = (jax.random.uniform(k_m, (N_GRAPHS, N_NODES, N_NODES)) < 0.5).astype(jnp.float32)
    adj = weights * mask

    params = build_params(k_params)
    padded = pad_params(params)

    # Pack graphs into lane/sublane-aligned groups.
    x_pad = jnp.pad(x, ((0, 0), (0, 0), (0, F_PAD - IN_FEATS)))
    x_grp = x_pad.reshape(N_GROUPS, M_TILE, F_PAD)
    x_flat = x_pad.reshape(N_GROUPS * M_TILE, F_PAD)

    def group_block_diag(adj_graphs):           # (G, N, N) -> (G*N, G*N)
        g = adj_graphs.shape[0]
        eye = jnp.eye(g, dtype=adj_graphs.dtype)
        bd = jnp.einsum("ij,ipq->ipjq", eye, adj_graphs)
        return bd.reshape(g * N_NODES, g * N_NODES)

    adj_grp = jax.vmap(group_block_diag)(
        adj.reshape(N_GROUPS, GRAPHS_PER_GROUP, N_NODES, N_NODES))

    if _single_tensorcore_chip():
        # v5e / v6e: one grid step, M=256 matmul chain, per-group adj dots.
        out_pad = gcn_forward_single(x_flat, adj_grp, padded)
        out_pad = out_pad.reshape(N_GROUPS, M_TILE, OUT_PAD)
    else:
        # v7x (2 TCs) and other multi-core parts: one group per core.
        out_pad = gcn_forward_parallel(x_grp, adj_grp, padded)
    out_pad = jax.block_until_ready(out_pad)

    out = out_pad.reshape(N_GRAPHS, N_NODES, OUT_PAD)[:, :, :OUT_FEATS]
    ref = reference_forward(x, adj, params)

    assert out.shape == (N_GRAPHS, N_NODES, OUT_FEATS)
    assert jnp.allclose(out, ref, atol=1e-4, rtol=1e-4), "mismatch vs reference"

    print("KERNEL_OK")
</pallas_src>

<mosaic_0001>
module attributes {stable_mosaic.version = 11 : i64} {
  func.func @gcn_kernel_grouped(%arg0: i32, %arg1: memref<1x128x128xf32, #tpu.memory_space<vmem>>, %arg2: memref<1x128x128xf32, #tpu.memory_space<vmem>>, %arg3: memref<128x128xf32, #tpu.memory_space<vmem>>, %arg4: memref<1x128xf32, #tpu.memory_space<vmem>>, %arg5: memref<128x128xf32, #tpu.memory_space<vmem>>, %arg6: memref<128x128xf32, #tpu.memory_space<vmem>>, %arg7: memref<1x128xf32, #tpu.memory_space<vmem>>, %arg8: memref<128x128xf32, #tpu.memory_space<vmem>>, %arg9: memref<128x128xf32, #tpu.memory_space<vmem>>, %arg10: memref<1x128xf32, #tpu.memory_space<vmem>>, %arg11: memref<128x128xf32, #tpu.memory_space<vmem>>, %arg12: memref<128x128xf32, #tpu.memory_space<vmem>>, %arg13: memref<1x128xf32, #tpu.memory_space<vmem>>, %arg14: memref<128x128xf32, #tpu.memory_space<vmem>>, %arg15: memref<1x128xf32, #tpu.memory_space<vmem>>, %arg16: memref<1x128x128xf32, #tpu.memory_space<vmem>>) attributes {dimension_semantics = [#tpu.dimension_semantics<parallel>], iteration_bounds = array<i64: 2>, scalar_prefetch = 0 : i64, scratch_operands = 0 : i64, tpu.core_type = #tpu.core_type<tc>, window_params = [{transform_indices = @transform_0, window_bounds = array<i64: 1, 128, 128>}, {transform_indices = @transform_1, window_bounds = array<i64: 1, 128, 128>}, {pipeline_mode = #tpu.pipeline_mode<synchronous>, transform_indices = @transform_2, window_bounds = array<i64: 128, 128>}, {pipeline_mode = #tpu.pipeline_mode<synchronous>, transform_indices = @transform_3, window_bounds = array<i64: 1, 128>}, {pipeline_mode = #tpu.pipeline_mode<synchronous>, transform_indices = @transform_4, window_bounds = array<i64: 128, 128>}, {pipeline_mode = #tpu.pipeline_mode<synchronous>, transform_indices = @transform_5, window_bounds = array<i64: 128, 128>}, {pipeline_mode = #tpu.pipeline_mode<synchronous>, transform_indices = @transform_6, window_bounds = array<i64: 1, 128>}, {pipeline_mode = #tpu.pipeline_mode<synchronous>, transform_indices = @transform_7, window_bounds = array<i64: 128, 128>}, {pipeline_mode = #tpu.pipeline_mode<synchronous>, transform_indices = @transform_8, window_bounds = array<i64: 128, 128>}, {pipeline_mode = #tpu.pipeline_mode<synchronous>, transform_indices = @transform_9, window_bounds = array<i64: 1, 128>}, {pipeline_mode = #tpu.pipeline_mode<synchronous>, transform_indices = @transform_10, window_bounds = array<i64: 128, 128>}, {pipeline_mode = #tpu.pipeline_mode<synchronous>, transform_indices = @transform_11, window_bounds = array<i64: 128, 128>}, {pipeline_mode = #tpu.pipeline_mode<synchronous>, transform_indices = @transform_12, window_bounds = array<i64: 1, 128>}, {pipeline_mode = #tpu.pipeline_mode<synchronous>, transform_indices = @transform_13, window_bounds = array<i64: 128, 128>}, {pipeline_mode = #tpu.pipeline_mode<synchronous>, transform_indices = @transform_14, window_bounds = array<i64: 1, 128>}, {transform_indices = @transform_15, window_bounds = array<i64: 1, 128, 128>}]} {
    %c0 = arith.constant 0 : index
    %c0_0 = arith.constant 0 : index
    %c0_1 = arith.constant 0 : index
    %0 = vector.load %arg1[%c0, %c0_0, %c0_1] : memref<1x128x128xf32, #tpu.memory_space<vmem>>, vector<1x128x128xf32>
    %1 = vector.shape_cast %0 : vector<1x128x128xf32> to vector<128x128xf32>
    %c0_2 = arith.constant 0 : index
    %c0_3 = arith.constant 0 : index
    %c0_4 = arith.constant 0 : index
    %2 = vector.load %arg2[%c0_2, %c0_3, %c0_4] : memref<1x128x128xf32, #tpu.memory_space<vmem>>, vector<1x128x128xf32>
    %3 = vector.shape_cast %2 : vector<1x128x128xf32> to vector<128x128xf32>
    %c0_5 = arith.constant 0 : index
    %c0_6 = arith.constant 0 : index
    %4 = vector.load %arg3[%c0_5, %c0_6] : memref<128x128xf32, #tpu.memory_space<vmem>>, vector<128x128xf32>
    %cst = arith.constant dense<0.000000e+00> : vector<128x128xf32>
    %5 = tpu.matmul %1, %4, %cst {dimension_numbers = #tpu.dot_dimension_numbers<[1], [0], [0], [1], [0, 0, 1, 1], [], []>} : vector<128x128xf32>, vector<128x128xf32>, vector<128x128xf32> -> vector<128x128xf32>
    %c0_7 = arith.constant 0 : index
    %c0_8 = arith.constant 0 : index
    %6 = vector.load %arg4[%c0_7, %c0_8] : memref<1x128xf32, #tpu.memory_space<vmem>>, vector<1x128xf32>
    %7 = vector.broadcast %6 : vector<1x128xf32> to vector<128x128xf32>
    %8 = arith.addf %5, %7 : vector<128x128xf32>
    %9 = math.tanh %8 : vector<128x128xf32>
    %cst_9 = arith.constant dense<0.000000e+00> : vector<128x128xf32>
    %10 = tpu.matmul %3, %9, %cst_9 {dimension_numbers = #tpu.dot_dimension_numbers<[1], [0], [0], [1], [0, 0, 1, 1], [], []>} : vector<128x128xf32>, vector<128x128xf32>, vector<128x128xf32> -> vector<128x128xf32>
    %c0_10 = arith.constant 0 : index
    %c0_11 = arith.constant 0 : index
    %11 = vector.load %arg5[%c0_10, %c0_11] : memref<128x128xf32, #tpu.memory_space<vmem>>, vector<128x128xf32>
    %cst_12 = arith.constant dense<0.000000e+00> : vector<128x128xf32>
    %12 = tpu.matmul %9, %11, %cst_12 {dimension_numbers = #tpu.dot_dimension_numbers<[1], [0], [0], [1], [0, 0, 1, 1], [], []>} : vector<128x128xf32>, vector<128x128xf32>, vector<128x128xf32> -> vector<128x128xf32>
    %c0_13 = arith.constant 0 : index
    %c0_14 = arith.constant 0 : index
    %13 = vector.load %arg6[%c0_13, %c0_14] : memref<128x128xf32, #tpu.memory_space<vmem>>, vector<128x128xf32>
    %cst_15 = arith.constant dense<0.000000e+00> : vector<128x128xf32>
    %14 = tpu.matmul %10, %13, %cst_15 {dimension_numbers = #tpu.dot_dimension_numbers<[1], [0], [0], [1], [0, 0, 1, 1], [], []>} : vector<128x128xf32>, vector<128x128xf32>, vector<128x128xf32> -> vector<128x128xf32>
    %15 = arith.addf %12, %14 : vector<128x128xf32>
    %c0_16 = arith.constant 0 : index
    %c0_17 = arith.constant 0 : index
    %16 = vector.load %arg7[%c0_16, %c0_17] : memref<1x128xf32, #tpu.memory_space<vmem>>, vector<1x128xf32>
    %17 = vector.broadcast %16 : vector<1x128xf32> to vector<128x128xf32>
    %18 = arith.addf %15, %17 : vector<128x128xf32>
    %cst_18 = arith.constant 0.000000e+00 : f32
    %19 = vector.broadcast %cst_18 : f32 to vector<128x128xf32>
    %20 = arith.maximumf %18, %19 : vector<128x128xf32>
    %cst_19 = arith.constant dense<0.000000e+00> : vector<128x128xf32>
    %21 = tpu.matmul %3, %20, %cst_19 {dimension_numbers = #tpu.dot_dimension_numbers<[1], [0], [0], [1], [0, 0, 1, 1], [], []>} : vector<128x128xf32>, vector<128x128xf32>, vector<128x128xf32> -> vector<128x128xf32>
    %c0_20 = arith.constant 0 : index
    %c0_21 = arith.constant 0 : index
    %22 = vector.load %arg8[%c0_20, %c0_21] : memref<128x128xf32, #tpu.memory_space<vmem>>, vector<128x128xf32>
    %cst_22 = arith.constant dense<0.000000e+00> : vector<128x128xf32>
    %23 = tpu.matmul %20, %22, %cst_22 {dimension_numbers = #tpu.dot_dimension_numbers<[1], [0], [0], [1], [0, 0, 1, 1], [], []>} : vector<128x128xf32>, vector<128x128xf32>, vector<128x128xf32> -> vector<128x128xf32>
    %c0_23 = arith.constant 0 : index
    %c0_24 = arith.constant 0 : index
    %24 = vector.load %arg9[%c0_23, %c0_24] : memref<128x128xf32, #tpu.memory_space<vmem>>, vector<128x128xf32>
    %cst_25 = arith.constant dense<0.000000e+00> : vector<128x128xf32>
    %25 = tpu.matmul %21, %24, %cst_25 {dimension_numbers = #tpu.dot_dimension_numbers<[1], [0], [0], [1], [0, 0, 1, 1], [], []>} : vector<128x128xf32>, vector<128x128xf32>, vector<128x128xf32> -> vector<128x128xf32>
    %26 = arith.addf %23, %25 : vector<128x128xf32>
    %c0_26 = arith.constant 0 : index
    %c0_27 = arith.constant 0 : index
    %27 = vector.load %arg10[%c0_26, %c0_27] : memref<1x128xf32, #tpu.memory_space<vmem>>, vector<1x128xf32>
    %28 = vector.broadcast %27 : vector<1x128xf32> to vector<128x128xf32>
    %29 = arith.addf %26, %28 : vector<128x128xf32>
    %cst_28 = arith.constant 0.000000e+00 : f32
    %30 = vector.broadcast %cst_28 : f32 to vector<128x128xf32>
    %31 = arith.maximumf %29, %30 : vector<128x128xf32>
    %cst_29 = arith.constant dense<0.000000e+00> : vector<128x128xf32>
    %32 = tpu.matmul %3, %31, %cst_29 {dimension_numbers = #tpu.dot_dimension_numbers<[1], [0], [0], [1], [0, 0, 1, 1], [], []>} : vector<128x128xf32>, vector<128x128xf32>, vector<128x128xf32> -> vector<128x128xf32>
    %c0_30 = arith.constant 0 : index
    %c0_31 = arith.constant 0 : index
    %33 = vector.load %arg11[%c0_30, %c0_31] : memref<128x128xf32, #tpu.memory_space<vmem>>, vector<128x128xf32>
    %cst_32 = arith.constant dense<0.000000e+00> : vector<128x128xf32>
    %34 = tpu.matmul %31, %33, %cst_32 {dimension_numbers = #tpu.dot_dimension_numbers<[1], [0], [0], [1], [0, 0, 1, 1], [], []>} : vector<128x128xf32>, vector<128x128xf32>, vector<128x128xf32> -> vector<128x128xf32>
    %c0_33 = arith.constant 0 : index
    %c0_34 = arith.constant 0 : index
    %35 = vector.load %arg12[%c0_33, %c0_34] : memref<128x128xf32, #tpu.memory_space<vmem>>, vector<128x128xf32>
    %cst_35 = arith.constant dense<0.000000e+00> : vector<128x128xf32>
    %36 = tpu.matmul %32, %35, %cst_35 {dimension_numbers = #tpu.dot_dimension_numbers<[1], [0], [0], [1], [0, 0, 1, 1], [], []>} : vector<128x128xf32>, vector<128x128xf32>, vector<128x128xf32> -> vector<128x128xf32>
    %37 = arith.addf %34, %36 : vector<128x128xf32>
    %c0_36 = arith.constant 0 : index
    %c0_37 = arith.constant 0 : index
    %38 = vector.load %arg13[%c0_36, %c0_37] : memref<1x128xf32, #tpu.memory_space<vmem>>, vector<1x128xf32>
    %39 = vector.broadcast %38 : vector<1x128xf32> to vector<128x128xf32>
    %40 = arith.addf %37, %39 : vector<128x128xf32>
    %cst_38 = arith.constant 0.000000e+00 : f32
    %41 = vector.broadcast %cst_38 : f32 to vector<128x128xf32>
    %42 = arith.maximumf %40, %41 : vector<128x128xf32>
    %c0_39 = arith.constant 0 : index
    %c0_40 = arith.constant 0 : index
    %43 = vector.load %arg14[%c0_39, %c0_40] : memref<128x128xf32, #tpu.memory_space<vmem>>, vector<128x128xf32>
    %cst_41 = arith.constant dense<0.000000e+00> : vector<128x128xf32>
    %44 = tpu.matmul %42, %43, %cst_41 {dimension_numbers = #tpu.dot_dimension_numbers<[1], [0], [0], [1], [0, 0, 1, 1], [], []>} : vector<128x128xf32>, vector<128x128xf32>, vector<128x128xf32> -> vector<128x128xf32>
    %c0_42 = arith.constant 0 : index
    %c0_43 = arith.constant 0 : index
    %45 = vector.load %arg15[%c0_42, %c0_43] : memref<1x128xf32, #tpu.memory_space<vmem>>, vector<1x128xf32>
    %46 = vector.broadcast %45 : vector<1x128xf32> to vector<128x128xf32>
    %47 = arith.addf %44, %46 : vector<128x128xf32>
    %48 = arith.negf %47 : vector<128x128xf32>
    %49 = math.exp %48 : vector<128x128xf32>
    %cst_44 = arith.constant 1.000000e+00 : f32
    %50 = vector.broadcast %cst_44 : f32 to vector<128x128xf32>
    %51 = arith.addf %50, %49 : vector<128x128xf32>
    %52 = arith.divf %50, %51 : vector<128x128xf32>
    %c0_45 = arith.constant 0 : index
    %c0_46 = arith.constant 0 : index
    %c0_47 = arith.constant 0 : index
    %53 = vector.load %arg16[%c0_45, %c0_46, %c0_47] : memref<1x128x128xf32, #tpu.memory_space<vmem>>, vector<1x128x128xf32>
    %54 = vector.shape_cast %53 : vector<1x128x128xf32> to vector<128x128xf32>
    %55 = vector.shape_cast %52 : vector<128x128xf32> to vector<1x128x128xf32>
    tpu.vector_store %arg16[%c0_45, %c0_46, %c0_47], %55 {strides = array<i32>} : memref<1x128x128xf32, #tpu.memory_space<vmem>>, vector<1x128x128xf32>,
    return
  }
  func.func @transform_0(%arg0: i32) -> (i32, i32, i32) {
    %c0_i32 = arith.constant 0 : i32
    %c0_i32_0 = arith.constant 0 : i32
    %c0_i32_1 = arith.constant 0 : i32
    return %arg0, %c0_i32, %c0_i32_0 : i32, i32, i32
  }
  func.func @transform_1(%arg0: i32) -> (i32, i32, i32) {
    %c0_i32 = arith.constant 0 : i32
    %c0_i32_0 = arith.constant 0 : i32
    %c0_i32_1 = arith.constant 0 : i32
    return %arg0, %c0_i32, %c0_i32_0 : i32, i32, i32
  }
  func.func @transform_2(%arg0: i32) -> (i32, i32) {
    %c0_i32 = arith.constant 0 : i32
    %c0_i32_0 = arith.constant 0 : i32
    %c0_i32_1 = arith.constant 0 : i32
    return %c0_i32, %c0_i32_0 : i32, i32
  }
  func.func @transform_3(%arg0: i32) -> (i32, i32) {
    %c0_i32 = arith.constant 0 : i32
    %c0_i32_0 = arith.constant 0 : i32
    %c0_i32_1 = arith.constant 0 : i32
    return %c0_i32, %c0_i32_0 : i32, i32
  }
  func.func @transform_4(%arg0: i32) -> (i32, i32) {
    %c0_i32 = arith.constant 0 : i32
    %c0_i32_0 = arith.constant 0 : i32
    %c0_i32_1 = arith.constant 0 : i32
    return %c0_i32, %c0_i32_0 : i32, i32
  }
  func.func @transform_5(%arg0: i32) -> (i32, i32) {
    %c0_i32 = arith.constant 0 : i32
    %c0_i32_0 = arith.constant 0 : i32
    %c0_i32_1 = arith.constant 0 : i32
    return %c0_i32, %c0_i32_0 : i32, i32
  }
  func.func @transform_6(%arg0: i32) -> (i32, i32) {
    %c0_i32 = arith.constant 0 : i32
    %c0_i32_0 = arith.constant 0 : i32
    %c0_i32_1 = arith.constant 0 : i32
    return %c0_i32, %c0_i32_0 : i32, i32
  }
  func.func @transform_7(%arg0: i32) -> (i32, i32) {
    %c0_i32 = arith.constant 0 : i32
    %c0_i32_0 = arith.constant 0 : i32
    %c0_i32_1 = arith.constant 0 : i32
    return %c0_i32, %c0_i32_0 : i32, i32
  }
  func.func @transform_8(%arg0: i32) -> (i32, i32) {
    %c0_i32 = arith.constant 0 : i32
    %c0_i32_0 = arith.constant 0 : i32
    %c0_i32_1 = arith.constant 0 : i32
    return %c0_i32, %c0_i32_0 : i32, i32
  }
  func.func @transform_9(%arg0: i32) -> (i32, i32) {
    %c0_i32 = arith.constant 0 : i32
    %c0_i32_0 = arith.constant 0 : i32
    %c0_i32_1 = arith.constant 0 : i32
    return %c0_i32, %c0_i32_0 : i32, i32
  }
  func.func @transform_10(%arg0: i32) -> (i32, i32) {
    %c0_i32 = arith.constant 0 : i32
    %c0_i32_0 = arith.constant 0 : i32
    %c0_i32_1 = arith.constant 0 : i32
    return %c0_i32, %c0_i32_0 : i32, i32
  }
  func.func @transform_11(%arg0: i32) -> (i32, i32) {
    %c0_i32 = arith.constant 0 : i32
    %c0_i32_0 = arith.constant 0 : i32
    %c0_i32_1 = arith.constant 0 : i32
    return %c0_i32, %c0_i32_0 : i32, i32
  }
  func.func @transform_12(%arg0: i32) -> (i32, i32) {
    %c0_i32 = arith.constant 0 : i32
    %c0_i32_0 = arith.constant 0 : i32
    %c0_i32_1 = arith.constant 0 : i32
    return %c0_i32, %c0_i32_0 : i32, i32
  }
  func.func @transform_13(%arg0: i32) -> (i32, i32) {
    %c0_i32 = arith.constant 0 : i32
    %c0_i32_0 = arith.constant 0 : i32
    %c0_i32_1 = arith.constant 0 : i32
    return %c0_i32, %c0_i32_0 : i32, i32
  }
  func.func @transform_14(%arg0: i32) -> (i32, i32) {
    %c0_i32 = arith.constant 0 : i32
    %c0_i32_0 = arith.constant 0 : i32
    %c0_i32_1 = arith.constant 0 : i32
    return %c0_i32, %c0_i32_0 : i32, i32
  }
  func.func @transform_15(%arg0: i32) -> (i32, i32, i32) {
    %c0_i32 = arith.constant 0 : i32
    %c0_i32_0 = arith.constant 0 : i32
    %c0_i32_1 = arith.constant 0 : i32
    return %arg0, %c0_i32, %c0_i32_0 : i32, i32, i32
  }
}

</mosaic_0001>

<llo_original>
// kernel: tpu_custom_call.1
$region0: #{tpu_custom_call.1}
  #allocation0 [shape = 'u32[]', space=smem, size = 0x4, offset = 0x4, fixed_abs, tag = 'smem constant byte address 0x4 - core index']
  #allocation1 [shape = 'u32[72,128]{1,0:T(1,128)}', space=vmem, size = 0x9000, scoped, tag = 'internal scratch']
  %s0 = inlined_call_operand.hbm [shape: f32[2,128,128], index: 0, kind: input, shape index: {}]
  %s1 = inlined_call_operand.hbm [shape: f32[2,128,128], index: 1, kind: input, shape index: {}]
  %s2 = inlined_call_operand.hbm [shape: f32[128,128], index: 2, kind: input, shape index: {}]
  %s3 = inlined_call_operand.vmem [shape: f32[1,128], index: 3, kind: input, shape index: {}]
  %s4 = inlined_call_operand.hbm [shape: f32[128,128], index: 4, kind: input, shape index: {}]
  %s5 = inlined_call_operand.hbm [shape: f32[128,128], index: 5, kind: input, shape index: {}]
  %s6 = inlined_call_operand.vmem [shape: f32[1,128], index: 6, kind: input, shape index: {}]
  %s7 = inlined_call_operand.hbm [shape: f32[128,128], index: 7, kind: input, shape index: {}]
  %s8 = inlined_call_operand.hbm [shape: f32[128,128], index: 8, kind: input, shape index: {}]
  %s9 = inlined_call_operand.vmem [shape: f32[1,128], index: 9, kind: input, shape index: {}]
  %s10 = inlined_call_operand.hbm [shape: f32[128,128], index: 10, kind: input, shape index: {}]
  %s11 = inlined_call_operand.hbm [shape: f32[128,128], index: 11, kind: input, shape index: {}]
  %s12 = inlined_call_operand.vmem [shape: f32[1,128], index: 12, kind: input, shape index: {}]
  %s13 = inlined_call_operand.hbm [shape: f32[128,128], index: 13, kind: input, shape index: {}]
  %s14 = inlined_call_operand.vmem [shape: f32[1,128], index: 14, kind: input, shape index: {}]
  %s15 = inlined_call_operand.hbm [shape: f32[2,128,128], index: 15, kind: output, shape index: {}]
  %s16 = sld [smem:[#allocation0]]
  $region133: #{tpu_custom_call.1} parent=0
    _
  %s18 = ssub.s32 1, %s16
  %s19 = scalar_select 0, %s18, %s16
  $region1: #{tpu_custom_call.1} parent=0
    #allocation2 [shape = 'u8[131072]{0}', space=vmem, size = 0x20000, scoped, tag = 'input window, operand 0']
    #allocation3 [shape = 's32[2]{0}', space=sflag, size = 0x8, scoped, tag = 'scoped memory for tpu_custom_call.1']
    #allocation4 [shape = 's32[2]{0}', space=sflag, size = 0x8, scoped, tag = 'scoped memory for tpu_custom_call.1']
    #allocation5 [shape = 'u8[131072]{0}', space=vmem, size = 0x20000, scoped, tag = 'input window, operand 1']
    #allocation6 [shape = 's32[2]{0}', space=sflag, size = 0x8, scoped, tag = 'scoped memory for tpu_custom_call.1']
    #allocation7 [shape = 'u8[65536]{0}', space=vmem, size = 0x10000, scoped, tag = 'input window, operand 2, single buffered']
    #allocation8 [shape = 'u8[65536]{0}', space=vmem, size = 0x10000, scoped, tag = 'input window, operand 4, single buffered']
    #allocation9 [shape = 's32[1]{0}', space=sflag, size = 0x4, scoped, tag = 'scoped memory for tpu_custom_call.1']
    #allocation10 [shape = 'u8[65536]{0}', space=vmem, size = 0x10000, scoped, tag = 'input window, operand 5, single buffered']
    #allocation11 [shape = 'u8[65536]{0}', space=vmem, size = 0x10000, scoped, tag = 'input window, operand 7, single buffered']
    #allocation12 [shape = 's32[1]{0}', space=sflag, size = 0x4, scoped, tag = 'scoped memory for tpu_custom_call.1']
    #allocation13 [shape = 'u8[65536]{0}', space=vmem, size = 0x10000, scoped, tag = 'input window, operand 8, single buffered']
    #allocation14 [shape = 'u8[65536]{0}', space=vmem, size = 0x10000, scoped, tag = 'input window, operand 10, single buffered']
    #allocation15 [shape = 's32[1]{0}', space=sflag, size = 0x4, scoped, tag = 'scoped memory for tpu_custom_call.1']
    #allocation16 [shape = 'u8[65536]{0}', space=vmem, size = 0x10000, scoped, tag = 'input window, operand 11, single buffered']
    #allocation17 [shape = 'u8[65536]{0}', space=vmem, size = 0x10000, scoped, tag = 'input window, operand 13, single buffered']
    #allocation18 [shape = 's32[1]{0}', space=sflag, size = 0x4, scoped, tag = 'scoped memory for tpu_custom_call.1']
    #allocation19 [shape = 'u8[131072]{0}', space=vmem, size = 0x20000, scoped, tag = 'output window, operand 0']
    %20 = vsyncpa [#allocation3], 0
    %s21 = scalar_lea.sflag [#allocation3], 1
    %22 = vsyncpa %s21, 0
    %23 = vsyncpa [#allocation6], 0
    %s24 = scalar_lea.sflag [#allocation6], 1
    %25 = vsyncpa %s24, 0
    %26 = vsyncpa [#allocation9], 0
    %27 = vsyncpa [#allocation12], 0
    %28 = vsyncpa [#allocation15], 0
    %29 = vsyncpa [#allocation18], 0
    %30 = vsyncpa [#allocation4], 0
    %s31 = scalar_lea.sflag [#allocation4], 1
    %32 = vsyncpa %s31, 0
    loop: start=0, step=1, limit=4
    $region2: #{tpu_custom_call.1} parent=1 // loop_pre_header
      _
    $region3: #{tpu_custom_call.1} parent=1 // loop_header
      %s34 = sphi 0, %s38
      %p35 = scmp.ge.s32.totalorder %s34, 4
      %s44 = sphi 0, %s46
      %s47 = sphi 0, %s44
      %s48 = sphi 0, %s47
      %s64 = sphi 0, %s48
      %s70 = sphi 0, %s72
      %s73 = sphi 0, %s70
      %s74 = sphi 0, %s73
      %s90 = sphi 0, %s74
      %s94 = sphi 0, %s94
      %s96 = sphi 0, %s94
      %s97 = sphi 0, %s96
      %s111 = sphi 0, %s97
      %s115 = sphi 0, %s115
      %s117 = sphi 0, %s115
      %s118 = sphi 0, %s117
      %s132 = sphi 0, %s118
      %s136 = sphi 0, %s136
      %s138 = sphi 0, %s136
      %s139 = sphi 0, %s138
      %s153 = sphi 0, %s139
      %s157 = sphi 0, %s157
      %s159 = sphi 0, %s157
      %s160 = sphi 0, %s159
      %s174 = sphi 0, %s160
      %s178 = sphi 0, %s178
      %s180 = sphi 0, %s178
      %s181 = sphi 0, %s180
      %s195 = sphi 0, %s181
      %s199 = sphi 0, %s199
      %s201 = sphi 0, %s199
      %s202 = sphi 0, %s201
      %s216 = sphi 0, %s202
      %s220 = sphi 0, %s220
      %s222 = sphi 0, %s220
      %s223 = sphi 0, %s222
      %s237 = sphi 0, %s223
      %s241 = sphi 0, %s241
      %s243 = sphi 0, %s241
      %s244 = sphi 0, %s243
      %s258 = sphi 0, %s244
      %s262 = sphi 0, %s262
      %s264 = sphi 0, %s262
      %s265 = sphi 0, %s264
      %s279 = sphi 0, %s265
      %s283 = sphi 0, %s283
      %s285 = sphi 0, %s283
      %s286 = sphi 0, %s285
      %s300 = sphi 0, %s286
      %s304 = sphi 0, %s304
      %s306 = sphi 0, %s304
      %s307 = sphi 0, %s306
      %s321 = sphi 0, %s307
      %s325 = sphi 0, %s325
      %s327 = sphi 0, %s325
      %s328 = sphi 0, %s327
      %s342 = sphi 0, %s328
      %s346 = sphi 0, %s346
      %s348 = sphi 0, %s346
      %s349 = sphi 0, %s348
      %s363 = sphi 0, %s349
      %s369 = sphi 0, %s371
      %s372 = sphi 0, %s369
      %s373 = sphi 0, %s372
      %s389 = sphi 0, %s373
    $region4: #{tpu_custom_call.1} parent=1 // loop_header_branch
      %37 = sbr.rel (%p35) target = $region8
    $region5: #{tpu_custom_call.1} parent=1 // loop_body
      %s39 = ssub.s32 %s34, 1
      %s40 = ssub.s32 %s34, 2
      %s41 = sadd.s32 %s34, 1
      %s42 = ssub.s32 %s34, %s41
      %p43 = scmp.eq.s32.totalorder %s42, 0
      %s45 = sadd.s32 %s44, 1
      %s46 = scalar_select %p43, %s44, %s45
      %p49 = pneg %p43
      %p50 = scmp.eq.s32.totalorder %s34, 1
      %p51 = por %p49, %p50
      %p52 = scmp.ne.s32.totalorder %s44, %s47
      %p53 = scmp.eq.s32.totalorder %s34, 0
      %p54 = por %p52, %p53
      %p55 = scmp.ne.s32.totalorder %s44, %s47
      %p56 = scmp.eq.s32.totalorder %s39, 1
      %p57 = por %p55, %p56
      %p58 = scmp.ne.s32.totalorder %s47, %s48
      %p59 = scmp.eq.s32.totalorder %s39, 0
      %p60 = por %p58, %p59
      %p61 = scmp.ne.s32.totalorder %s47, %s48
      %p62 = scmp.eq.s32.totalorder %s40, 1
      %p63 = por %p61, %p62
      %p65 = scmp.ne.s32.totalorder %s48, %s64
      %p66 = scmp.eq.s32.totalorder %s40, 0
      %p67 = por %p65, %p66
      %s68 = ssub.s32 %s34, %s41
      %p69 = scmp.eq.s32.totalorder %s68, 0
      %s71 = sadd.s32 %s70, 1
      %s72 = scalar_select %p69, %s70, %s71
      %p75 = pneg %p69
      %p76 = scmp.eq.s32.totalorder %s34, 1
      %p77 = por %p75, %p76
      %p78 = scmp.ne.s32.totalorder %s70, %s73
      %p79 = scmp.eq.s32.totalorder %s34, 0
      %p80 = por %p78, %p79
      %p81 = scmp.ne.s32.totalorder %s70, %s73
      %p82 = scmp.eq.s32.totalorder %s39, 1
      %p83 = por %p81, %p82
      %p84 = scmp.ne.s32.totalorder %s73, %s74
      %p85 = scmp.eq.s32.totalorder %s39, 0
      %p86 = por %p84, %p85
      %p87 = scmp.ne.s32.totalorder %s73, %s74
      %p88 = scmp.eq.s32.totalorder %s40, 1
      %p89 = por %p87, %p88
      %p91 = scmp.ne.s32.totalorder %s74, %s90
      %p92 = scmp.eq.s32.totalorder %s40, 0
      %p93 = por %p91, %p92
      %s95 = sadd.s32 %s94, 1
      %p98 = scmp.eq.s32.totalorder %s34, 1
      %p99 = scmp.ne.s32.totalorder %s94, %s96
      %p100 = scmp.eq.s32.totalorder %s34, 0
      %p101 = por %p99, %p100
      %p102 = scmp.ne.s32.totalorder %s94, %s96
      %p103 = scmp.eq.s32.totalorder %s39, 1
      %p104 = por %p102, %p103
      %p105 = scmp.ne.s32.totalorder %s96, %s97
      %p106 = scmp.eq.s32.totalorder %s39, 0
      %p107 = por %p105, %p106
      %p108 = scmp.ne.s32.totalorder %s96, %s97
      %p109 = scmp.eq.s32.totalorder %s40, 1
      %p110 = por %p108, %p109
      %p112 = scmp.ne.s32.totalorder %s97, %s111
      %p113 = scmp.eq.s32.totalorder %s40, 0
      %p114 = por %p112, %p113
      %s116 = sadd.s32 %s115, 1
      %p119 = scmp.eq.s32.totalorder %s34, 1
      %p120 = scmp.ne.s32.totalorder %s115, %s117
      %p121 = scmp.eq.s32.totalorder %s34, 0
      %p122 = por %p120, %p121
      %p123 = scmp.ne.s32.totalorder %s115, %s117
      %p124 = scmp.eq.s32.totalorder %s39, 1
      %p125 = por %p123, %p124
      %p126 = scmp.ne.s32.totalorder %s117, %s118
      %p127 = scmp.eq.s32.totalorder %s39, 0
      %p128 = por %p126, %p127
      %p129 = scmp.ne.s32.totalorder %s117, %s118
      %p130 = scmp.eq.s32.totalorder %s40, 1
      %p131 = por %p129, %p130
      %p133 = scmp.ne.s32.totalorder %s118, %s132
      %p134 = scmp.eq.s32.totalorder %s40, 0
      %p135 = por %p133, %p134
      %s137 = sadd.s32 %s136, 1
      %p140 = scmp.eq.s32.totalorder %s34, 1
      %p141 = scmp.ne.s32.totalorder %s136, %s138
      %p142 = scmp.eq.s32.totalorder %s34, 0
      %p143 = por %p141, %p142
      %p144 = scmp.ne.s32.totalorder %s136, %s138
      %p145 = scmp.eq.s32.totalorder %s39, 1
      %p146 = por %p144, %p145
      %p147 = scmp.ne.s32.totalorder %s138, %s139
      %p148 = scmp.eq.s32.totalorder %s39, 0
      %p149 = por %p147, %p148
      %p150 = scmp.ne.s32.totalorder %s138, %s139
      %p151 = scmp.eq.s32.totalorder %s40, 1
      %p152 = por %p150, %p151
      %p154 = scmp.ne.s32.totalorder %s139, %s153
      %p155 = scmp.eq.s32.totalorder %s40, 0
      %p156 = por %p154, %p155
      %s158 = sadd.s32 %s157, 1
      %p161 = scmp.eq.s32.totalorder %s34, 1
      %p162 = scmp.ne.s32.totalorder %s157, %s159
      %p163 = scmp.eq.s32.totalorder %s34, 0
      %p164 = por %p162, %p163
      %p165 = scmp.ne.s32.totalorder %s157, %s159
      %p166 = scmp.eq.s32.totalorder %s39, 1
      %p167 = por %p165, %p166
      %p168 = scmp.ne.s32.totalorder %s159, %s160
      %p169 = scmp.eq.s32.totalorder %s39, 0
      %p170 = por %p168, %p169
      %p171 = scmp.ne.s32.totalorder %s159, %s160
      %p172 = scmp.eq.s32.totalorder %s40, 1
      %p173 = por %p171, %p172
      %p175 = scmp.ne.s32.totalorder %s160, %s174
      %p176 = scmp.eq.s32.totalorder %s40, 0
      %p177 = por %p175, %p176
      %s179 = sadd.s32 %s178, 1
      %p182 = scmp.eq.s32.totalorder %s34, 1
      %p183 = scmp.ne.s32.totalorder %s178, %s180
      %p184 = scmp.eq.s32.totalorder %s34, 0
      %p185 = por %p183, %p184
      %p186 = scmp.ne.s32.totalorder %s178, %s180
      %p187 = scmp.eq.s32.totalorder %s39, 1
      %p188 = por %p186, %p187
      %p189 = scmp.ne.s32.totalorder %s180, %s181
      %p190 = scmp.eq.s32.totalorder %s39, 0
      %p191 = por %p189, %p190
      %p192 = scmp.ne.s32.totalorder %s180, %s181
      %p193 = scmp.eq.s32.totalorder %s40, 1
      %p194 = por %p192, %p193
      %p196 = scmp.ne.s32.totalorder %s181, %s195
      %p197 = scmp.eq.s32.totalorder %s40, 0
      %p198 = por %p196, %p197
      %s200 = sadd.s32 %s199, 1
      %p203 = scmp.eq.s32.totalorder %s34, 1
      %p204 = scmp.ne.s32.totalorder %s199, %s201
      %p205 = scmp.eq.s32.totalorder %s34, 0
      %p206 = por %p204, %p205
      %p207 = scmp.ne.s32.totalorder %s199, %s201
      %p208 = scmp.eq.s32.totalorder %s39, 1
      %p209 = por %p207, %p208
      %p210 = scmp.ne.s32.totalorder %s201, %s202
      %p211 = scmp.eq.s32.totalorder %s39, 0
      %p212 = por %p210, %p211
      %p213 = scmp.ne.s32.totalorder %s201, %s202
      %p214 = scmp.eq.s32.totalorder %s40, 1
      %p215 = por %p213, %p214
      %p217 = scmp.ne.s32.totalorder %s202, %s216
      %p218 = scmp.eq.s32.totalorder %s40, 0
      %p219 = por %p217, %p218
      %s221 = sadd.s32 %s220, 1
      %p224 = scmp.eq.s32.totalorder %s34, 1
      %p225 = scmp.ne.s32.totalorder %s220, %s222
      %p226 = scmp.eq.s32.totalorder %s34, 0
      %p227 = por %p225, %p226
      %p228 = scmp.ne.s32.totalorder %s220, %s222
      %p229 = scmp.eq.s32.totalorder %s39, 1
      %p230 = por %p228, %p229
      %p231 = scmp.ne.s32.totalorder %s222, %s223
      %p232 = scmp.eq.s32.totalorder %s39, 0
      %p233 = por %p231, %p232
      %p234 = scmp.ne.s32.totalorder %s222, %s223
      %p235 = scmp.eq.s32.totalorder %s40, 1
      %p236 = por %p234, %p235
      %p238 = scmp.ne.s32.totalorder %s223, %s237
      %p239 = scmp.eq.s32.totalorder %s40, 0
      %p240 = por %p238, %p239
      %s242 = sadd.s32 %s241, 1
      %p245 = scmp.eq.s32.totalorder %s34, 1
      %p246 = scmp.ne.s32.totalorder %s241, %s243
      %p247 = scmp.eq.s32.totalorder %s34, 0
      %p248 = por %p246, %p247
      %p249 = scmp.ne.s32.totalorder %s241, %s243
      %p250 = scmp.eq.s32.totalorder %s39, 1
      %p251 = por %p249, %p250
      %p252 = scmp.ne.s32.totalorder %s243, %s244
      %p253 = scmp.eq.s32.totalorder %s39, 0
      %p254 = por %p252, %p253
      %p255 = scmp.ne.s32.totalorder %s243, %s244
      %p256 = scmp.eq.s32.totalorder %s40, 1
      %p257 = por %p255, %p256
      %p259 = scmp.ne.s32.totalorder %s244, %s258
      %p260 = scmp.eq.s32.totalorder %s40, 0
      %p261 = por %p259, %p260
      %s263 = sadd.s32 %s262, 1
      %p266 = scmp.eq.s32.totalorder %s34, 1
      %p267 = scmp.ne.s32.totalorder %s262, %s264
      %p268 = scmp.eq.s32.totalorder %s34, 0
      %p269 = por %p267, %p268
      %p270 = scmp.ne.s32.totalorder %s262, %s264
      %p271 = scmp.eq.s32.totalorder %s39, 1
      %p272 = por %p270, %p271
      %p273 = scmp.ne.s32.totalorder %s264, %s265
      %p274 = scmp.eq.s32.totalorder %s39, 0
      %p275 = por %p273, %p274
      %p276 = scmp.ne.s32.totalorder %s264, %s265
      %p277 = scmp.eq.s32.totalorder %s40, 1
      %p278 = por %p276, %p277
      %p280 = scmp.ne.s32.totalorder %s265, %s279
      %p281 = scmp.eq.s32.totalorder %s40, 0
      %p282 = por %p280, %p281
      %s284 = sadd.s32 %s283, 1
      %p287 = scmp.eq.s32.totalorder %s34, 1
      %p288 = scmp.ne.s32.totalorder %s283, %s285
      %p289 = scmp.eq.s32.totalorder %s34, 0
      %p290 = por %p288, %p289
      %p291 = scmp.ne.s32.totalorder %s283, %s285
      %p292 = scmp.eq.s32.totalorder %s39, 1
      %p293 = por %p291, %p292
      %p294 = scmp.ne.s32.totalorder %s285, %s286
      %p295 = scmp.eq.s32.totalorder %s39, 0
      %p296 = por %p294, %p295
      %p297 = scmp.ne.s32.totalorder %s285, %s286
      %p298 = scmp.eq.s32.totalorder %s40, 1
      %p299 = por %p297, %p298
      %p301 = scmp.ne.s32.totalorder %s286, %s300
      %p302 = scmp.eq.s32.totalorder %s40, 0
      %p303 = por %p301, %p302
      %s305 = sadd.s32 %s304, 1
      %p308 = scmp.eq.s32.totalorder %s34, 1
      %p309 = scmp.ne.s32.totalorder %s304, %s306
      %p310 = scmp.eq.s32.totalorder %s34, 0
      %p311 = por %p309, %p310
      %p312 = scmp.ne.s32.totalorder %s304, %s306
      %p313 = scmp.eq.s32.totalorder %s39, 1
      %p314 = por %p312, %p313
      %p315 = scmp.ne.s32.totalorder %s306, %s307
      %p316 = scmp.eq.s32.totalorder %s39, 0
      %p317 = por %p315, %p316
      %p318 = scmp.ne.s32.totalorder %s306, %s307
      %p319 = scmp.eq.s32.totalorder %s40, 1
      %p320 = por %p318, %p319
      %p322 = scmp.ne.s32.totalorder %s307, %s321
      %p323 = scmp.eq.s32.totalorder %s40, 0
      %p324 = por %p322, %p323
      %s326 = sadd.s32 %s325, 1
      %p329 = scmp.eq.s32.totalorder %s34, 1
      %p330 = scmp.ne.s32.totalorder %s325, %s327
      %p331 = scmp.eq.s32.totalorder %s34, 0
      %p332 = por %p330, %p331
      %p333 = scmp.ne.s32.totalorder %s325, %s327
      %p334 = scmp.eq.s32.totalorder %s39, 1
      %p335 = por %p333, %p334
      %p336 = scmp.ne.s32.totalorder %s327, %s328
      %p337 = scmp.eq.s32.totalorder %s39, 0
      %p338 = por %p336, %p337
      %p339 = scmp.ne.s32.totalorder %s327, %s328
      %p340 = scmp.eq.s32.totalorder %s40, 1
      %p341 = por %p339, %p340
      %p343 = scmp.ne.s32.totalorder %s328, %s342
      %p344 = scmp.eq.s32.totalorder %s40, 0
      %p345 = por %p343, %p344
      %s347 = sadd.s32 %s346, 1
      %p350 = scmp.eq.s32.totalorder %s34, 1
      %p351 = scmp.ne.s32.totalorder %s346, %s348
      %p352 = scmp.eq.s32.totalorder %s34, 0
      %p353 = por %p351, %p352
      %p354 = scmp.ne.s32.totalorder %s346, %s348
      %p355 = scmp.eq.s32.totalorder %s39, 1
      %p356 = por %p354, %p355
      %p357 = scmp.ne.s32.totalorder %s348, %s349
      %p358 = scmp.eq.s32.totalorder %s39, 0
      %p359 = por %p357, %p358
      %p360 = scmp.ne.s32.totalorder %s348, %s349
      %p361 = scmp.eq.s32.totalorder %s40, 1
      %p362 = por %p360, %p361
      %p364 = scmp.ne.s32.totalorder %s349, %s363
      %p365 = scmp.eq.s32.totalorder %s40, 0
      %p366 = por %p364, %p365
      %s367 = ssub.s32 %s34, %s41
      %p368 = scmp.eq.s32.totalorder %s367, 0
      %s370 = sadd.s32 %s369, 1
      %s371 = scalar_select %p368, %s369, %s370
      %p374 = pneg %p368
      %p375 = scmp.eq.s32.totalorder %s34, 1
      %p376 = por %p374, %p375
      %p377 = scmp.ne.s32.totalorder %s369, %s372
      %p378 = scmp.eq.s32.totalorder %s34, 0
      %p379 = por %p377, %p378
      %p380 = scmp.ne.s32.totalorder %s369, %s372
      %p381 = scmp.eq.s32.totalorder %s39, 1
      %p382 = por %p380, %p381
      %p383 = scmp.ne.s32.totalorder %s372, %s373
      %p384 = scmp.eq.s32.totalorder %s39, 0
      %p385 = por %p383, %p384
      %p386 = scmp.ne.s32.totalorder %s372, %s373
      %p387 = scmp.eq.s32.totalorder %s40, 1
      %p388 = por %p386, %p387
      %p390 = scmp.ne.s32.totalorder %s373, %s389
      %p391 = scmp.eq.s32.totalorder %s40, 0
      %p392 = por %p390, %p391
      %p393 = scmp.le.s32.totalorder 1, %s34
      %p394 = scmp.lt.s32.totalorder %s34, 3
      %p395 = pnand %p393, %p394
      %p396 = pneg %p395
      // Predicated region
      $region9: #{tpu_custom_call.1} parent=5 // pred_check
        _
      $region10: #{tpu_custom_call.1} parent=5 // pred_check_branch
        %398 = sbr.rel (%p395) target = $region12
      $region11: #{tpu_custom_call.1} parent=5 // pred_region
        %s399 = ssub.s32 %s34, 1
        // Predicated region
        $region13: #{tpu_custom_call.1} parent=11 // pred_check
          %p400 = pneg %p107
        $region14: #{tpu_custom_call.1} parent=11 // pred_check_branch
          %402 = sbr.rel (%p400) target = $region16
        $region15: #{tpu_custom_call.1} parent=11 // pred_region
          %404 = vsyncadd [#allocation6], 0
          %s405 = sshll.u32 %s2, 4
          %s406 = int_to_ptr.hbm [resolvable:$true] %s405
          %s407 = sshll.u32 [#allocation7], 4
          %s408 = int_to_ptr.vmem [resolvable:$true] %s407
          %413 = dma.hbm_to_vmem [thread:$0]  %s406, 2048, %s408, [#allocation6], 128, 128, 8
        $region16: #{tpu_custom_call.1} parent=11 // pred_fallthru
          _
        // Predicated region
        $region17: #{tpu_custom_call.1} parent=11 // pred_check
          %p414 = pneg %p128
        $region18: #{tpu_custom_call.1} parent=11 // pred_check_branch
          %416 = sbr.rel (%p414) target = $region20
        $region19: #{tpu_custom_call.1} parent=11 // pred_region
          _
        $region20: #{tpu_custom_call.1} parent=11 // pred_fallthru
          _
        // Predicated region
        $region21: #{tpu_custom_call.1} parent=11 // pred_check
          %p417 = pneg %p149
        $region22: #{tpu_custom_call.1} parent=11 // pred_check_branch
          %419 = sbr.rel (%p417) target = $region24
        $region23: #{tpu_custom_call.1} parent=11 // pred_region
          %421 = vsyncadd [#allocation9], 0
          %s422 = sshll.u32 %s4, 4
          %s423 = int_to_ptr.hbm [resolvable:$true] %s422
          %s424 = sshll.u32 [#allocation8], 4
          %s425 = int_to_ptr.vmem [resolvable:$true] %s424
          %430 = dma.hbm_to_vmem [thread:$0]  %s423, 2048, %s425, [#allocation9], 128, 128, 8
        $region24: #{tpu_custom_call.1} parent=11 // pred_fallthru
          _
        // Predicated region
        $region25: #{tpu_custom_call.1} parent=11 // pred_check
          %p431 = pneg %p170
        $region26: #{tpu_custom_call.1} parent=11 // pred_check_branch
          %433 = sbr.rel (%p431) target = $region28
        $region27: #{tpu_custom_call.1} parent=11 // pred_region
          %435 = vsyncadd [#allocation9], 0
          %s436 = sshll.u32 %s5, 4
          %s437 = int_to_ptr.hbm [resolvable:$true] %s436
          %s438 = sshll.u32 [#allocation10], 4
          %s439 = int_to_ptr.vmem [resolvable:$true] %s438
          %444 = dma.hbm_to_vmem [thread:$0]  %s437, 2048, %s439, [#allocation9], 128, 128, 8
        $region28: #{tpu_custom_call.1} parent=11 // pred_fallthru
          _
        // Predicated region
        $region29: #{tpu_custom_call.1} parent=11 // pred_check
          %p445 = pneg %p191
        $region30: #{tpu_custom_call.1} parent=11 // pred_check_branch
          %447 = sbr.rel (%p445) target = $region32
        $region31: #{tpu_custom_call.1} parent=11 // pred_region
          _
        $region32: #{tpu_custom_call.1} parent=11 // pred_fallthru
          _
        // Predicated region
        $region33: #{tpu_custom_call.1} parent=11 // pred_check
          %p448 = pneg %p212
        $region34: #{tpu_custom_call.1} parent=11 // pred_check_branch
          %450 = sbr.rel (%p448) target = $region36
        $region35: #{tpu_custom_call.1} parent=11 // pred_region
          %452 = vsyncadd [#allocation12], 0
          %s453 = sshll.u32 %s7, 4
          %s454 = int_to_ptr.hbm [resolvable:$true] %s453
          %s455 = sshll.u32 [#allocation11], 4
          %s456 = int_to_ptr.vmem [resolvable:$true] %s455
          %461 = dma.hbm_to_vmem [thread:$0]  %s454, 2048, %s456, [#allocation12], 128, 128, 8
        $region36: #{tpu_custom_call.1} parent=11 // pred_fallthru
          _
        // Predicated region
        $region37: #{tpu_custom_call.1} parent=11 // pred_check
          %p462 = pneg %p233
        $region38: #{tpu_custom_call.1} parent=11 // pred_check_branch
          %464 = sbr.rel (%p462) target = $region40
        $region39: #{tpu_custom_call.1} parent=11 // pred_region
          %466 = vsyncadd [#allocation12], 0
          %s467 = sshll.u32 %s8, 4
          %s468 = int_to_ptr.hbm [resolvable:$true] %s467
          %s469 = sshll.u32 [#allocation13], 4
          %s470 = int_to_ptr.vmem [resolvable:$true] %s469
          %475 = dma.hbm_to_vmem [thread:$0]  %s468, 2048, %s470, [#allocation12], 128, 128, 8
        $region40: #{tpu_custom_call.1} parent=11 // pred_fallthru
          _
        // Predicated region
        $region41: #{tpu_custom_call.1} parent=11 // pred_check
          %p476 = pneg %p254
        $region42: #{tpu_custom_call.1} parent=11 // pred_check_branch
          %478 = sbr.rel (%p476) target = $region44
        $region43: #{tpu_custom_call.1} parent=11 // pred_region
          _
        $region44: #{tpu_custom_call.1} parent=11 // pred_fallthru
          _
        // Predicated region
        $region45: #{tpu_custom_call.1} parent=11 // pred_check
          %p479 = pneg %p275
        $region46: #{tpu_custom_call.1} parent=11 // pred_check_branch
          %481 = sbr.rel (%p479) target = $region48
        $region47: #{tpu_custom_call.1} parent=11 // pred_region
          %483 = vsyncadd [#allocation15], 0
          %s484 = sshll.u32 %s10, 4
          %s485 = int_to_ptr.hbm [resolvable:$true] %s484
          %s486 = sshll.u32 [#allocation14], 4
          %s487 = int_to_ptr.vmem [resolvable:$true] %s486
          %492 = dma.hbm_to_vmem [thread:$0]  %s485, 2048, %s487, [#allocation15], 128, 128, 8
        $region48: #{tpu_custom_call.1} parent=11 // pred_fallthru
          _
        // Predicated region
        $region49: #{tpu_custom_call.1} parent=11 // pred_check
          %p493 = pneg %p296
        $region50: #{tpu_custom_call.1} parent=11 // pred_check_branch
          %495 = sbr.rel (%p493) target = $region52
        $region51: #{tpu_custom_call.1} parent=11 // pred_region
          %497 = vsyncadd [#allocation15], 0
          %s498 = sshll.u32 %s11, 4
          %s499 = int_to_ptr.hbm [resolvable:$true] %s498
          %s500 = sshll.u32 [#allocation16], 4
          %s501 = int_to_ptr.vmem [resolvable:$true] %s500
          %506 = dma.hbm_to_vmem [thread:$0]  %s499, 2048, %s501, [#allocation15], 128, 128, 8
        $region52: #{tpu_custom_call.1} parent=11 // pred_fallthru
          _
        // Predicated region
        $region53: #{tpu_custom_call.1} parent=11 // pred_check
          %p507 = pneg %p317
        $region54: #{tpu_custom_call.1} parent=11 // pred_check_branch
          %509 = sbr.rel (%p507) target = $region56
        $region55: #{tpu_custom_call.1} parent=11 // pred_region
          _
        $region56: #{tpu_custom_call.1} parent=11 // pred_fallthru
          _
        // Predicated region
        $region57: #{tpu_custom_call.1} parent=11 // pred_check
          %p510 = pneg %p338
        $region58: #{tpu_custom_call.1} parent=11 // pred_check_branch
          %512 = sbr.rel (%p510) target = $region60
        $region59: #{tpu_custom_call.1} parent=11 // pred_region
          %514 = vsyncadd [#allocation18], 0
          %s515 = sshll.u32 %s13, 4
          %s516 = int_to_ptr.hbm [resolvable:$true] %s515
          %s517 = sshll.u32 [#allocation17], 4
          %s518 = int_to_ptr.vmem [resolvable:$true] %s517
          %523 = dma.hbm_to_vmem [thread:$0]  %s516, 2048, %s518, [#allocation18], 128, 128, 8
        $region60: #{tpu_custom_call.1} parent=11 // pred_fallthru
          _
        // Predicated region
        $region61: #{tpu_custom_call.1} parent=11 // pred_check
          %p524 = pneg %p359
        $region62: #{tpu_custom_call.1} parent=11 // pred_check_branch
          %526 = sbr.rel (%p524) target = $region64
        $region63: #{tpu_custom_call.1} parent=11 // pred_region
          _
        $region64: #{tpu_custom_call.1} parent=11 // pred_fallthru
          _
      $region12: #{tpu_custom_call.1} parent=5 // pred_fallthru
        _
      %p527 = scmp.lt.s32.totalorder %s34, 2
      // Predicated region
      $region65: #{tpu_custom_call.1} parent=5 // pred_check
        %p528 = pneg %p527
      $region66: #{tpu_custom_call.1} parent=5 // pred_check_branch
        %530 = sbr.rel (%p528) target = $region68
      $region67: #{tpu_custom_call.1} parent=5 // pred_region
        // Predicated region
        $region69: #{tpu_custom_call.1} parent=67 // pred_check
          %p531 = pneg %p54
        $region70: #{tpu_custom_call.1} parent=67 // pred_check_branch
          %533 = sbr.rel (%p531) target = $region72
        $region71: #{tpu_custom_call.1} parent=67 // pred_region
          %s534 = sand.u32 %s44, 1
          %s535 = scalar_lea.sflag [#allocation3], %s534
          %s536 = sand.u32 %s44, 1
          %s537 = smul.addr %s536, 128
          %s538 = scalar_lea.vmem [#allocation2], %s537
          %540 = vsyncadd %s535, 0
          %s541 = smul.addr %s34, 16
          %s542 = smul.addr %s541, 8
          %s543 = scalar_lea.hbm %s0, %s542
          %s544 = sshll.u32 %s543, 4
          %s545 = int_to_ptr.hbm [resolvable:$true] %s544
          %s546 = sshll.u32 %s538, 4
          %s547 = int_to_ptr.vmem [resolvable:$true] %s546
          %552 = dma.hbm_to_vmem [thread:$0]  %s545, 2048, %s547, %s535, 128, 128, 8
        $region72: #{tpu_custom_call.1} parent=67 // pred_fallthru
          _
        // Predicated region
        $region73: #{tpu_custom_call.1} parent=67 // pred_check
          %p553 = pneg %p80
        $region74: #{tpu_custom_call.1} parent=67 // pred_check_branch
          %555 = sbr.rel (%p553) target = $region76
        $region75: #{tpu_custom_call.1} parent=67 // pred_region
          %s556 = sand.u32 %s34, 1
          %s557 = scalar_lea.sflag [#allocation6], %s556
          %s558 = sand.u32 %s70, 1
          %s559 = smul.addr %s558, 128
          %s560 = scalar_lea.vmem [#allocation5], %s559
          %562 = vsyncadd %s557, 0
          %s563 = smul.addr %s34, 16
          %s564 = smul.addr %s563, 8
          %s565 = scalar_lea.hbm %s1, %s564
          %s566 = sshll.u32 %s565, 4
          %s567 = int_to_ptr.hbm [resolvable:$true] %s566
          %s568 = sshll.u32 %s560, 4
          %s569 = int_to_ptr.vmem [resolvable:$true] %s568
          %574 = dma.hbm_to_vmem [thread:$0]  %s567, 2048, %s569, %s557, 128, 128, 8
        $region76: #{tpu_custom_call.1} parent=67 // pred_fallthru
          _
      $region68: #{tpu_custom_call.1} parent=5 // pred_fallthru
        _
      %p575 = scmp.le.s32.totalorder 1, %s34
      %p576 = scmp.lt.s32.totalorder %s34, 3
      %p577 = pnand %p575, %p576
      %p578 = pneg %p577
      // Predicated region
      $region77: #{tpu_custom_call.1} parent=5 // pred_check
        _
      $region78: #{tpu_custom_call.1} parent=5 // pred_check_branch
        %580 = sbr.rel (%p577) target = $region80
      $region79: #{tpu_custom_call.1} parent=5 // pred_region
        %s581 = ssub.s32 %s34, 1
        %s582 = sand.u32 %s47, 1
        %s583 = scalar_lea.sflag [#allocation3], %s582
        %s584 = sand.u32 %s47, 1
        %s585 = smul.addr %s584, 128
        %s586 = scalar_lea.vmem [#allocation2], %s585
        // Predicated region
        $region81: #{tpu_custom_call.1} parent=79 // pred_check
          %p587 = pneg %p60
        $region82: #{tpu_custom_call.1} parent=79 // pred_check_branch
          %589 = sbr.rel (%p587) target = $region84
        $region83: #{tpu_custom_call.1} parent=79 // pred_region
          %591 = dma.done %s583, 2048
        $region84: #{tpu_custom_call.1} parent=79 // pred_fallthru
          _
        %s592 = sand.u32 %s39, 1
        %s593 = scalar_lea.sflag [#allocation6], %s592
        %s594 = sand.u32 %s73, 1
        %s595 = smul.addr %s594, 128
        %s596 = scalar_lea.vmem [#allocation5], %s595
        // Predicated region
        $region85: #{tpu_custom_call.1} parent=79 // pred_check
          %p597 = pneg %p86
        $region86: #{tpu_custom_call.1} parent=79 // pred_check_branch
          %599 = sbr.rel (%p597) target = $region88
        $region87: #{tpu_custom_call.1} parent=79 // pred_region
          %601 = dma.done %s593, 2048
        $region88: #{tpu_custom_call.1} parent=79 // pred_fallthru
          _
        // Predicated region
        $region89: #{tpu_custom_call.1} parent=79 // pred_check
          %p602 = pneg %p107
        $region90: #{tpu_custom_call.1} parent=79 // pred_check_branch
          %604 = sbr.rel (%p602) target = $region92
        $region91: #{tpu_custom_call.1} parent=79 // pred_region
          %606 = dma.done [#allocation6], 2048
        $region92: #{tpu_custom_call.1} parent=79 // pred_fallthru
          _
        // Predicated region
        $region93: #{tpu_custom_call.1} parent=79 // pred_check
          %p607 = pneg %p149
        $region94: #{tpu_custom_call.1} parent=79 // pred_check_branch
          %609 = sbr.rel (%p607) target = $region96
        $region95: #{tpu_custom_call.1} parent=79 // pred_region
          %611 = dma.done [#allocation9], 2048
        $region96: #{tpu_custom_call.1} parent=79 // pred_fallthru
          _
        // Predicated region
        $region97: #{tpu_custom_call.1} parent=79 // pred_check
          %p612 = pneg %p170
        $region98: #{tpu_custom_call.1} parent=79 // pred_check_branch
          %614 = sbr.rel (%p612) target = $region100
        $region99: #{tpu_custom_call.1} parent=79 // pred_region
          %616 = dma.done [#allocation9], 2048
        $region100: #{tpu_custom_call.1} parent=79 // pred_fallthru
          _
        // Predicated region
        $region101: #{tpu_custom_call.1} parent=79 // pred_check
          %p617 = pneg %p212
        $region102: #{tpu_custom_call.1} parent=79 // pred_check_branch
          %619 = sbr.rel (%p617) target = $region104
        $region103: #{tpu_custom_call.1} parent=79 // pred_region
          %621 = dma.done [#allocation12], 2048
        $region104: #{tpu_custom_call.1} parent=79 // pred_fallthru
          _
        // Predicated region
        $region105: #{tpu_custom_call.1} parent=79 // pred_check
          %p622 = pneg %p233
        $region106: #{tpu_custom_call.1} parent=79 // pred_check_branch
          %624 = sbr.rel (%p622) target = $region108
        $region107: #{tpu_custom_call.1} parent=79 // pred_region
          %626 = dma.done [#allocation12], 2048
        $region108: #{tpu_custom_call.1} parent=79 // pred_fallthru
          _
        // Predicated region
        $region109: #{tpu_custom_call.1} parent=79 // pred_check
          %p627 = pneg %p275
        $region110: #{tpu_custom_call.1} parent=79 // pred_check_branch
          %629 = sbr.rel (%p627) target = $region112
        $region111: #{tpu_custom_call.1} parent=79 // pred_region
          %631 = dma.done [#allocation15], 2048
        $region112: #{tpu_custom_call.1} parent=79 // pred_fallthru
          _
        // Predicated region
        $region113: #{tpu_custom_call.1} parent=79 // pred_check
          %p632 = pneg %p296
        $region114: #{tpu_custom_call.1} parent=79 // pred_check_branch
          %634 = sbr.rel (%p632) target = $region116
        $region115: #{tpu_custom_call.1} parent=79 // pred_region
          %636 = dma.done [#allocation15], 2048
        $region116: #{tpu_custom_call.1} parent=79 // pred_fallthru
          _
        // Predicated region
        $region117: #{tpu_custom_call.1} parent=79 // pred_check
          %p637 = pneg %p338
        $region118: #{tpu_custom_call.1} parent=79 // pred_check_branch
          %639 = sbr.rel (%p637) target = $region120
        $region119: #{tpu_custom_call.1} parent=79 // pred_region
          %641 = dma.done [#allocation18], 2048
        $region120: #{tpu_custom_call.1} parent=79 // pred_fallthru
          _
        %s642 = sand.u32 %s47, 1
        %s643 = scalar_lea.sflag [#allocation3], %s642
        %s644 = sand.u32 %s47, 1
        %s645 = smul.addr %s644, 128
        %s646 = scalar_lea.vmem [#allocation2], %s645
        %p647 = pneg %p60
        %p648 = pneg %p57
        %s649 = sand.u32 %s39, 1
        %s650 = scalar_lea.sflag [#allocation6], %s649
        %s651 = sand.u32 %s73, 1
        %s652 = smul.addr %s651, 128
        %s653 = scalar_lea.vmem [#allocation5], %s652
        %p654 = pneg %p86
        %p655 = pneg %p83
        %p656 = pneg %p107
        %p657 = pneg %p104
        %p658 = pneg %p128
        %p659 = pneg %p125
        %p660 = pneg %p149
        %p661 = pneg %p146
        %p662 = pneg %p170
        %p663 = pneg %p167
        %p664 = pneg %p191
        %p665 = pneg %p188
        %p666 = pneg %p212
        %p667 = pneg %p209
        %p668 = pneg %p233
        %p669 = pneg %p230
        %p670 = pneg %p254
        %p671 = pneg %p251
        %p672 = pneg %p275
        %p673 = pneg %p272
        %p674 = pneg %p296
        %p675 = pneg %p293
        %p676 = pneg %p317
        %p677 = pneg %p314
        %p678 = pneg %p338
        %p679 = pneg %p335
        %p680 = pneg %p359
        %p681 = pneg %p356
        %p682 = pneg %p385
        %p683 = pneg %p382
        %s684 = sand.u32 %s372, 1
        %s685 = scalar_lea.sflag [#allocation4], %s684
        %s686 = sand.u32 %s372, 1
        %s687 = smul.addr %s686, 128
        %s688 = scalar_lea.vmem [#allocation19], %s687
        %v689 = vld [vmem:[%s586] sm:$0xff]
        %v690 = vld [vmem:[%s586 + $0x8] sm:$0xff]
        %v691 = vld [vmem:[%s586 + $0x10] sm:$0xff]
        %v692 = vld [vmem:[%s586 + $0x18] sm:$0xff]
        %v693 = vld [vmem:[%s586 + $0x20] sm:$0xff]
        %v694 = vld [vmem:[%s586 + $0x28] sm:$0xff]
        %v695 = vld [vmem:[%s586 + $0x30] sm:$0xff]
        %v696 = vld [vmem:[%s586 + $0x38] sm:$0xff]
        %v697 = vld [vmem:[%s586 + $0x40] sm:$0xff]
        %v698 = vld [vmem:[%s586 + $0x48] sm:$0xff]
        %v699 = vld [vmem:[%s586 + $0x50] sm:$0xff]
        %v700 = vld [vmem:[%s586 + $0x58] sm:$0xff]
        %v701 = vld [vmem:[%s586 + $0x60] sm:$0xff]
        %v702 = vld [vmem:[%s586 + $0x68] sm:$0xff]
        %v703 = vld [vmem:[%s586 + $0x70] sm:$0xff]
        %v704 = vld [vmem:[%s586 + $0x78] sm:$0xff]
        %v705 = vld [vmem:[%s596] sm:$0xff]
        %v706 = vld [vmem:[%s596 + $0x8] sm:$0xff]
        %v707 = vld [vmem:[%s596 + $0x10] sm:$0xff]
        %v708 = vld [vmem:[%s596 + $0x18] sm:$0xff]
        %v709 = vld [vmem:[%s596 + $0x20] sm:$0xff]
        %v710 = vld [vmem:[%s596 + $0x28] sm:$0xff]
        %v711 = vld [vmem:[%s596 + $0x30] sm:$0xff]
        %v712 = vld [vmem:[%s596 + $0x38] sm:$0xff]
        %v713 = vld [vmem:[%s596 + $0x40] sm:$0xff]
        %v714 = vld [vmem:[%s596 + $0x48] sm:$0xff]
        %v715 = vld [vmem:[%s596 + $0x50] sm:$0xff]
        %v716 = vld [vmem:[%s596 + $0x58] sm:$0xff]
        %v717 = vld [vmem:[%s596 + $0x60] sm:$0xff]
        %v718 = vld [vmem:[%s596 + $0x68] sm:$0xff]
        %v719 = vld [vmem:[%s596 + $0x70] sm:$0xff]
        %v720 = vld [vmem:[%s596 + $0x78] sm:$0xff]
        %v721 = vld [vmem:[#allocation7] sm:$0xff]
        %v722 = vld [vmem:[#allocation7 + $0x8] sm:$0xff]
        %v723 = vld [vmem:[#allocation7 + $0x10] sm:$0xff]
        %v724 = vld [vmem:[#allocation7 + $0x18] sm:$0xff]
        %v725 = vld [vmem:[#allocation7 + $0x20] sm:$0xff]
        %v726 = vld [vmem:[#allocation7 + $0x28] sm:$0xff]
        %v727 = vld [vmem:[#allocation7 + $0x30] sm:$0xff]
        %v728 = vld [vmem:[#allocation7 + $0x38] sm:$0xff]
        %v729 = vld [vmem:[#allocation7 + $0x40] sm:$0xff]
        %v730 = vld [vmem:[#allocation7 + $0x48] sm:$0xff]
        %v731 = vld [vmem:[#allocation7 + $0x50] sm:$0xff]
        %v732 = vld [vmem:[#allocation7 + $0x58] sm:$0xff]
        %v733 = vld [vmem:[#allocation7 + $0x60] sm:$0xff]
        %v734 = vld [vmem:[#allocation7 + $0x68] sm:$0xff]
        %v735 = vld [vmem:[#allocation7 + $0x70] sm:$0xff]
        %v736 = vld [vmem:[#allocation7 + $0x78] sm:$0xff]
        %v737 = vld [vmem:[%s3] sm:$0x1]
        %v739 = vperm.slane %v737, 0
        %741 = vmatpush.msra.mxu0 %v736
        %742 = vmatpush.msra.mxu0 %v735
        %743 = vmatpush.msra.mxu0 %v734
        %744 = vmatpush.msra.mxu0 %v733
        %745 = vmatpush.msra.mxu0 %v732
        %746 = vmatpush.msra.mxu0 %v731
        %747 = vmatpush.msra.mxu0 %v730
        %748 = vmatpush.msra.mxu0 %v729
        %749 = vmatpush.msra.mxu0 %v728
        %750 = vmatpush.msra.mxu0 %v727
        %751 = vmatpush.msra.mxu0 %v726
        %752 = vmatpush.msra.mxu0 %v725
        %753 = vmatpush.msra.mxu0 %v724
        %754 = vmatpush.msra.mxu0 %v723
        %755 = vmatpush.msra.mxu0 %v722
        %756 = vmatpush.msra.mxu0 %v721
        %757 = vmatmul.f32.gmra.mxu0 %v689
        %v758 = vpop.f32.mrf.mxu0
        %v759 = vadd.f32 %v739, %v758
        %760 = vmatmul.f32.gmra.mxu0 %v690
        %v761 = vpop.f32.mrf.mxu0
        %v762 = vadd.f32 %v739, %v761
        %763 = vmatmul.f32.gmra.mxu0 %v691
        %v764 = vpop.f32.mrf.mxu0
        %v765 = vadd.f32 %v739, %v764
        %766 = vmatmul.f32.gmra.mxu0 %v692
        %v767 = vpop.f32.mrf.mxu0
        %v768 = vadd.f32 %v739, %v767
        %769 = vmatmul.f32.gmra.mxu0 %v693
        %v770 = vpop.f32.mrf.mxu0
        %v771 = vadd.f32 %v739, %v770
        %772 = vmatmul.f32.gmra.mxu0 %v694
        %v773 = vpop.f32.mrf.mxu0
        %v774 = vadd.f32 %v739, %v773
        %775 = vmatmul.f32.gmra.mxu0 %v695
        %v776 = vpop.f32.mrf.mxu0
        %v777 = vadd.f32 %v739, %v776
        %778 = vmatmul.f32.gmra.mxu0 %v696
        %v779 = vpop.f32.mrf.mxu0
        %v780 = vadd.f32 %v739, %v779
        %781 = vmatmul.f32.gmra.mxu0 %v697
        %v782 = vpop.f32.mrf.mxu0
        %v783 = vadd.f32 %v739, %v782
        %784 = vmatmul.f32.gmra.mxu0 %v698
        %v785 = vpop.f32.mrf.mxu0
        %v786 = vadd.f32 %v739, %v785
        %787 = vmatmul.f32.gmra.mxu0 %v699
        %v788 = vpop.f32.mrf.mxu0
        %v789 = vadd.f32 %v739, %v788
        %790 = vmatmul.f32.gmra.mxu0 %v700
        %v791 = vpop.f32.mrf.mxu0
        %v792 = vadd.f32 %v739, %v791
        %793 = vmatmul.f32.gmra.mxu0 %v701
        %v794 = vpop.f32.mrf.mxu0
        %v795 = vadd.f32 %v739, %v794
        %796 = vmatmul.f32.gmra.mxu0 %v702
        %v797 = vpop.f32.mrf.mxu0
        %v798 = vadd.f32 %v739, %v797
        %799 = vmatmul.f32.gmra.mxu0 %v703
        %v800 = vpop.f32.mrf.mxu0
        %v801 = vadd.f32 %v739, %v800
        %802 = vmatmul.f32.gmra.mxu0 %v704
        %v803 = vpop.f32.mrf.mxu0
        %v804 = vadd.f32 %v739, %v803
        %805 = vdwg.mxu0
        %v806 = vtanh.pop %v759
        %v807 = vtanh.pop %v762
        %v808 = vtanh.pop %v765
        %v809 = vtanh.pop %v768
        %v810 = vtanh.pop %v771
        %v811 = vtanh.pop %v774
        %v812 = vtanh.pop %v777
        %v813 = vtanh.pop %v780
        %v814 = vtanh.pop %v783
        %v815 = vtanh.pop %v786
        %v816 = vtanh.pop %v789
        %v817 = vtanh.pop %v792
        %v818 = vtanh.pop %v795
        %v819 = vtanh.pop %v798
        %v820 = vtanh.pop %v801
        %v821 = vtanh.pop %v804
        %822 = vmatpush.msra.mxu0 %v821
        %823 = vmatpush.msra.mxu0 %v820
        %824 = vmatpush.msra.mxu0 %v819
        %825 = vmatpush.msra.mxu0 %v818
        %826 = vmatpush.msra.mxu0 %v817
        %827 = vmatpush.msra.mxu0 %v816
        %828 = vmatpush.msra.mxu0 %v815
        %829 = vmatpush.msra.mxu0 %v814
        %830 = vmatpush.msra.mxu0 %v813
        %831 = vmatpush.msra.mxu0 %v812
        %832 = vmatpush.msra.mxu0 %v811
        %833 = vmatpush.msra.mxu0 %v810
        %834 = vmatpush.msra.mxu0 %v809
        %835 = vmatpush.msra.mxu0 %v808
        %836 = vmatpush.msra.mxu0 %v807
        %837 = vmatpush.msra.mxu0 %v806
        %838 = vmatmul.f32.gmra.mxu0 %v705
        %v839 = vpop.f32.mrf.mxu0
        %v840 = vadd.f32 0.0, %v839
        %841 = vmatmul.f32.gmra.mxu0 %v706
        %v842 = vpop.f32.mrf.mxu0
        %v843 = vadd.f32 0.0, %v842
        %844 = vmatmul.f32.gmra.mxu0 %v707
        %v845 = vpop.f32.mrf.mxu0
        %v846 = vadd.f32 0.0, %v845
        %847 = vmatmul.f32.gmra.mxu0 %v708
        %v848 = vpop.f32.mrf.mxu0
        %v849 = vadd.f32 0.0, %v848
        %850 = vmatmul.f32.gmra.mxu0 %v709
        %v851 = vpop.f32.mrf.mxu0
        %v852 = vadd.f32 0.0, %v851
        %853 = vmatmul.f32.gmra.mxu0 %v710
        %v854 = vpop.f32.mrf.mxu0
        %v855 = vadd.f32 0.0, %v854
        %856 = vmatmul.f32.gmra.mxu0 %v711
        %v857 = vpop.f32.mrf.mxu0
        %v858 = vadd.f32 0.0, %v857
        %859 = vmatmul.f32.gmra.mxu0 %v712
        %v860 = vpop.f32.mrf.mxu0
        %v861 = vadd.f32 0.0, %v860
        %862 = vmatmul.f32.gmra.mxu0 %v713
        %v863 = vpop.f32.mrf.mxu0
        %v864 = vadd.f32 0.0, %v863
        %865 = vmatmul.f32.gmra.mxu0 %v714
        %v866 = vpop.f32.mrf.mxu0
        %v867 = vadd.f32 0.0, %v866
        %868 = vmatmul.f32.gmra.mxu0 %v715
        %v869 = vpop.f32.mrf.mxu0
        %v870 = vadd.f32 0.0, %v869
        %871 = vmatmul.f32.gmra.mxu0 %v716
        %v872 = vpop.f32.mrf.mxu0
        %v873 = vadd.f32 0.0, %v872
        %874 = vmatmul.f32.gmra.mxu0 %v717
        %v875 = vpop.f32.mrf.mxu0
        %v876 = vadd.f32 0.0, %v875
        %877 = vmatmul.f32.gmra.mxu0 %v718
        %v878 = vpop.f32.mrf.mxu0
        %v879 = vadd.f32 0.0, %v878
        %880 = vmatmul.f32.gmra.mxu0 %v719
        %v881 = vpop.f32.mrf.mxu0
        %v882 = vadd.f32 0.0, %v881
        %883 = vmatmul.f32.gmra.mxu0 %v720
        %v884 = vpop.f32.mrf.mxu0
        %v885 = vadd.f32 0.0, %v884
        %886 = vdwg.mxu0
        %v887 = vld [vmem:[#allocation8] sm:$0xff]
        %v888 = vld [vmem:[#allocation8 + $0x8] sm:$0xff]
        %v889 = vld [vmem:[#allocation8 + $0x10] sm:$0xff]
        %v890 = vld [vmem:[#allocation8 + $0x18] sm:$0xff]
        %v891 = vld [vmem:[#allocation8 + $0x20] sm:$0xff]
        %v892 = vld [vmem:[#allocation8 + $0x28] sm:$0xff]
        %v893 = vld [vmem:[#allocation8 + $0x30] sm:$0xff]
        %v894 = vld [vmem:[#allocation8 + $0x38] sm:$0xff]
        %v895 = vld [vmem:[#allocation8 + $0x40] sm:$0xff]
        %v896 = vld [vmem:[#allocation8 + $0x48] sm:$0xff]
        %v897 = vld [vmem:[#allocation8 + $0x50] sm:$0xff]
        %v898 = vld [vmem:[#allocation8 + $0x58] sm:$0xff]
        %v899 = vld [vmem:[#allocation8 + $0x60] sm:$0xff]
        %v900 = vld [vmem:[#allocation8 + $0x68] sm:$0xff]
        %v901 = vld [vmem:[#allocation8 + $0x70] sm:$0xff]
        %v902 = vld [vmem:[#allocation8 + $0x78] sm:$0xff]
        %v903 = vld [vmem:[#allocation10] sm:$0xff]
        %v904 = vld [vmem:[#allocation10 + $0x8] sm:$0xff]
        %v905 = vld [vmem:[#allocation10 + $0x10] sm:$0xff]
        %v906 = vld [vmem:[#allocation10 + $0x18] sm:$0xff]
        %v907 = vld [vmem:[#allocation10 + $0x20] sm:$0xff]
        %v908 = vld [vmem:[#allocation10 + $0x28] sm:$0xff]
        %v909 = vld [vmem:[#allocation10 + $0x30] sm:$0xff]
        %v910 = vld [vmem:[#allocation10 + $0x38] sm:$0xff]
        %v911 = vld [vmem:[#allocation10 + $0x40] sm:$0xff]
        %v912 = vld [vmem:[#allocation10 + $0x48] sm:$0xff]
        %v913 = vld [vmem:[#allocation10 + $0x50] sm:$0xff]
        %v914 = vld [vmem:[#allocation10 + $0x58] sm:$0xff]
        %v915 = vld [vmem:[#allocation10 + $0x60] sm:$0xff]
        %v916 = vld [vmem:[#allocation10 + $0x68] sm:$0xff]
        %v917 = vld [vmem:[#allocation10 + $0x70] sm:$0xff]
        %v918 = vld [vmem:[#allocation10 + $0x78] sm:$0xff]
        %919 = vmatpush.msra.mxu0 %v918
        %920 = vmatpush.msra.mxu0 %v917
        %921 = vmatpush.msra.mxu0 %v916
        %922 = vmatpush.msra.mxu0 %v915
        %923 = vmatpush.msra.mxu0 %v914
        %924 = vmatpush.msra.mxu0 %v913
        %925 = vmatpush.msra.mxu0 %v912
        %926 = vmatpush.msra.mxu0 %v911
        %927 = vmatpush.msra.mxu0 %v910
        %928 = vmatpush.msra.mxu0 %v909
        %929 = vmatpush.msra.mxu0 %v908
        %930 = vmatpush.msra.mxu0 %v907
        %931 = vmatpush.msra.mxu0 %v906
        %932 = vmatpush.msra.mxu0 %v905
        %933 = vmatpush.msra.mxu0 %v904
        %934 = vmatpush.msra.mxu0 %v903
        %935 = vmatmul.f32.gmra.mxu0 %v840
        %v936 = vpop.f32.mrf.mxu0
        %v937 = vadd.f32 0.0, %v936
        %938 = vmatmul.f32.gmra.mxu0 %v843
        %v939 = vpop.f32.mrf.mxu0
        %v940 = vadd.f32 0.0, %v939
        %941 = vmatmul.f32.gmra.mxu0 %v846
        %v942 = vpop.f32.mrf.mxu0
        %v943 = vadd.f32 0.0, %v942
        %944 = vmatmul.f32.gmra.mxu0 %v849
        %v945 = vpop.f32.mrf.mxu0
        %v946 = vadd.f32 0.0, %v945
        %947 = vmatmul.f32.gmra.mxu0 %v852
        %v948 = vpop.f32.mrf.mxu0
        %v949 = vadd.f32 0.0, %v948
        %950 = vmatmul.f32.gmra.mxu0 %v855
        %v951 = vpop.f32.mrf.mxu0
        %v952 = vadd.f32 0.0, %v951
        %953 = vmatmul.f32.gmra.mxu0 %v858
        %v954 = vpop.f32.mrf.mxu0
        %v955 = vadd.f32 0.0, %v954
        %956 = vmatmul.f32.gmra.mxu0 %v861
        %v957 = vpop.f32.mrf.mxu0
        %v958 = vadd.f32 0.0, %v957
        %959 = vmatmul.f32.gmra.mxu0 %v864
        %v960 = vpop.f32.mrf.mxu0
        %v961 = vadd.f32 0.0, %v960
        %962 = vmatmul.f32.gmra.mxu0 %v867
        %v963 = vpop.f32.mrf.mxu0
        %v964 = vadd.f32 0.0, %v963
        %965 = vmatmul.f32.gmra.mxu0 %v870
        %v966 = vpop.f32.mrf.mxu0
        %v967 = vadd.f32 0.0, %v966
        %968 = vmatmul.f32.gmra.mxu0 %v873
        %v969 = vpop.f32.mrf.mxu0
        %v970 = vadd.f32 0.0, %v969
        %971 = vmatmul.f32.gmra.mxu0 %v876
        %v972 = vpop.f32.mrf.mxu0
        %v973 = vadd.f32 0.0, %v972
        %974 = vmatmul.f32.gmra.mxu0 %v879
        %v975 = vpop.f32.mrf.mxu0
        %v976 = vadd.f32 0.0, %v975
        %977 = vmatmul.f32.gmra.mxu0 %v882
        %v978 = vpop.f32.mrf.mxu0
        %v979 = vadd.f32 0.0, %v978
        %980 = vmatmul.f32.gmra.mxu0 %v885
        %v981 = vpop.f32.mrf.mxu0
        %v982 = vadd.f32 0.0, %v981
        %983 = vdwg.mxu0
        %984 = vmatpush.msra.mxu0 %v902
        %985 = vmatpush.msra.mxu0 %v901
        %986 = vmatpush.msra.mxu0 %v900
        %987 = vmatpush.msra.mxu0 %v899
        %988 = vmatpush.msra.mxu0 %v898
        %989 = vmatpush.msra.mxu0 %v897
        %990 = vmatpush.msra.mxu0 %v896
        %991 = vmatpush.msra.mxu0 %v895
        %992 = vmatpush.msra.mxu0 %v894
        %993 = vmatpush.msra.mxu0 %v893
        %994 = vmatpush.msra.mxu0 %v892
        %995 = vmatpush.msra.mxu0 %v891
        %996 = vmatpush.msra.mxu0 %v890
        %997 = vmatpush.msra.mxu0 %v889
        %998 = vmatpush.msra.mxu0 %v888
        %999 = vmatpush.msra.mxu0 %v887
        %1000 = vmatmul.f32.gmra.mxu0 %v806
        %v1001 = vpop.f32.mrf.mxu0
        %v1002 = vadd.f32 %v937, %v1001
        %1003 = vmatmul.f32.gmra.mxu0 %v807
        %v1004 = vpop.f32.mrf.mxu0
        %v1005 = vadd.f32 %v940, %v1004
        %1006 = vmatmul.f32.gmra.mxu0 %v808
        %v1007 = vpop.f32.mrf.mxu0
        %v1008 = vadd.f32 %v943, %v1007
        %1009 = vmatmul.f32.gmra.mxu0 %v809
        %v1010 = vpop.f32.mrf.mxu0
        %v1011 = vadd.f32 %v946, %v1010
        %1012 = vmatmul.f32.gmra.mxu0 %v810
        %v1013 = vpop.f32.mrf.mxu0
        %v1014 = vadd.f32 %v949, %v1013
        %1015 = vmatmul.f32.gmra.mxu0 %v811
        %v1016 = vpop.f32.mrf.mxu0
        %v1017 = vadd.f32 %v952, %v1016
        %1018 = vmatmul.f32.gmra.mxu0 %v812
        %v1019 = vpop.f32.mrf.mxu0
        %v1020 = vadd.f32 %v955, %v1019
        %1021 = vmatmul.f32.gmra.mxu0 %v813
        %v1022 = vpop.f32.mrf.mxu0
        %v1023 = vadd.f32 %v958, %v1022
        %1024 = vmatmul.f32.gmra.mxu0 %v814
        %v1025 = vpop.f32.mrf.mxu0
        %v1026 = vadd.f32 %v961, %v1025
        %1027 = vmatmul.f32.gmra.mxu0 %v815
        %v1028 = vpop.f32.mrf.mxu0
        %v1029 = vadd.f32 %v964, %v1028
        %1030 = vmatmul.f32.gmra.mxu0 %v816
        %v1031 = vpop.f32.mrf.mxu0
        %v1032 = vadd.f32 %v967, %v1031
        %1033 = vmatmul.f32.gmra.mxu0 %v817
        %v1034 = vpop.f32.mrf.mxu0
        %v1035 = vadd.f32 %v970, %v1034
        %1036 = vmatmul.f32.gmra.mxu0 %v818
        %v1037 = vpop.f32.mrf.mxu0
        %v1038 = vadd.f32 %v973, %v1037
        %1039 = vmatmul.f32.gmra.mxu0 %v819
        %v1040 = vpop.f32.mrf.mxu0
        %v1041 = vadd.f32 %v976, %v1040
        %1042 = vmatmul.f32.gmra.mxu0 %v820
        %v1043 = vpop.f32.mrf.mxu0
        %v1044 = vadd.f32 %v979, %v1043
        %1045 = vmatmul.f32.gmra.mxu0 %v821
        %v1046 = vpop.f32.mrf.mxu0
        %v1047 = vadd.f32 %v982, %v1046
        %1048 = vdwg.mxu0
        %v1049 = vld [vmem:[%s6] sm:$0x1]
        %v1051 = vperm.slane %v1049, 0
        %v1053 = vadd.f32 %v1002, %v1051
        %v1054 = vadd.f32 %v1005, %v1051
        %v1055 = vadd.f32 %v1008, %v1051
        %v1056 = vadd.f32 %v1011, %v1051
        %v1057 = vadd.f32 %v1014, %v1051
        %v1058 = vadd.f32 %v1017, %v1051
        %v1059 = vadd.f32 %v1020, %v1051
        %v1060 = vadd.f32 %v1023, %v1051
        %v1061 = vadd.f32 %v1026, %v1051
        %v1062 = vadd.f32 %v1029, %v1051
        %v1063 = vadd.f32 %v1032, %v1051
        %v1064 = vadd.f32 %v1035, %v1051
        %v1065 = vadd.f32 %v1038, %v1051
        %v1066 = vadd.f32 %v1041, %v1051
        %v1067 = vadd.f32 %v1044, %v1051
        %v1068 = vadd.f32 %v1047, %v1051
        %v1069 = vmax.f32 %v1053, 0.0
        %v1070 = vmax.f32 %v1054, 0.0
        %v1071 = vmax.f32 %v1055, 0.0
        %v1072 = vmax.f32 %v1056, 0.0
        %v1073 = vmax.f32 %v1057, 0.0
        %v1074 = vmax.f32 %v1058, 0.0
        %v1075 = vmax.f32 %v1059, 0.0
        %v1076 = vmax.f32 %v1060, 0.0
        %v1077 = vmax.f32 %v1061, 0.0
        %v1078 = vmax.f32 %v1062, 0.0
        %v1079 = vmax.f32 %v1063, 0.0
        %v1080 = vmax.f32 %v1064, 0.0
        %v1081 = vmax.f32 %v1065, 0.0
        %v1082 = vmax.f32 %v1066, 0.0
        %v1083 = vmax.f32 %v1067, 0.0
        %v1084 = vmax.f32 %v1068, 0.0
        %1085 = vmatpush.msra.mxu0 %v1084
        %1086 = vmatpush.msra.mxu0 %v1083
        %1087 = vmatpush.msra.mxu0 %v1082
        %1088 = vmatpush.msra.mxu0 %v1081
        %1089 = vmatpush.msra.mxu0 %v1080
        %1090 = vmatpush.msra.mxu0 %v1079
        %1091 = vmatpush.msra.mxu0 %v1078
        %1092 = vmatpush.msra.mxu0 %v1077
        %1093 = vmatpush.msra.mxu0 %v1076
        %1094 = vmatpush.msra.mxu0 %v1075
        %1095 = vmatpush.msra.mxu0 %v1074
        %1096 = vmatpush.msra.mxu0 %v1073
        %1097 = vmatpush.msra.mxu0 %v1072
        %1098 = vmatpush.msra.mxu0 %v1071
        %1099 = vmatpush.msra.mxu0 %v1070
        %1100 = vmatpush.msra.mxu0 %v1069
        %1101 = vmatmul.f32.gmra.mxu0 %v705
        %v1102 = vpop.f32.mrf.mxu0
        %v1103 = vadd.f32 0.0, %v1102
        %1104 = vmatmul.f32.gmra.mxu0 %v706
        %v1105 = vpop.f32.mrf.mxu0
        %v1106 = vadd.f32 0.0, %v1105
        %1107 = vmatmul.f32.gmra.mxu0 %v707
        %v1108 = vpop.f32.mrf.mxu0
        %v1109 = vadd.f32 0.0, %v1108
        %1110 = vmatmul.f32.gmra.mxu0 %v708
        %v1111 = vpop.f32.mrf.mxu0
        %v1112 = vadd.f32 0.0, %v1111
        %1113 = vmatmul.f32.gmra.mxu0 %v709
        %v1114 = vpop.f32.mrf.mxu0
        %v1115 = vadd.f32 0.0, %v1114
        %1116 = vmatmul.f32.gmra.mxu0 %v710
        %v1117 = vpop.f32.mrf.mxu0
        %v1118 = vadd.f32 0.0, %v1117
        %1119 = vmatmul.f32.gmra.mxu0 %v711
        %v1120 = vpop.f32.mrf.mxu0
        %v1121 = vadd.f32 0.0, %v1120
        %1122 = vmatmul.f32.gmra.mxu0 %v712
        %v1123 = vpop.f32.mrf.mxu0
        %v1124 = vadd.f32 0.0, %v1123
        %1125 = vmatmul.f32.gmra.mxu0 %v713
        %v1126 = vpop.f32.mrf.mxu0
        %v1127 = vadd.f32 0.0, %v1126
        %1128 = vmatmul.f32.gmra.mxu0 %v714
        %v1129 = vpop.f32.mrf.mxu0
        %v1130 = vadd.f32 0.0, %v1129
        %1131 = vmatmul.f32.gmra.mxu0 %v715
        %v1132 = vpop.f32.mrf.mxu0
        %v1133 = vadd.f32 0.0, %v1132
        %1134 = vmatmul.f32.gmra.mxu0 %v716
        %v1135 = vpop.f32.mrf.mxu0
        %v1136 = vadd.f32 0.0, %v1135
        %1137 = vmatmul.f32.gmra.mxu0 %v717
        %v1138 = vpop.f32.mrf.mxu0
        %v1139 = vadd.f32 0.0, %v1138
        %1140 = vmatmul.f32.gmra.mxu0 %v718
        %v1141 = vpop.f32.mrf.mxu0
        %v1142 = vadd.f32 0.0, %v1141
        %1143 = vmatmul.f32.gmra.mxu0 %v719
        %v1144 = vpop.f32.mrf.mxu0
        %v1145 = vadd.f32 0.0, %v1144
        %1146 = vmatmul.f32.gmra.mxu0 %v720
        %v1147 = vpop.f32.mrf.mxu0
        %v1148 = vadd.f32 0.0, %v1147
        %1149 = vdwg.mxu0
        %v1150 = vld [vmem:[#allocation11] sm:$0xff]
        %v1151 = vld [vmem:[#allocation11 + $0x8] sm:$0xff]
        %v1152 = vld [vmem:[#allocation11 + $0x10] sm:$0xff]
        %v1153 = vld [vmem:[#allocation11 + $0x18] sm:$0xff]
        %v1154 = vld [vmem:[#allocation11 + $0x20] sm:$0xff]
        %v1155 = vld [vmem:[#allocation11 + $0x28] sm:$0xff]
        %v1156 = vld [vmem:[#allocation11 + $0x30] sm:$0xff]
        %v1157 = vld [vmem:[#allocation11 + $0x38] sm:$0xff]
        %v1158 = vld [vmem:[#allocation11 + $0x40] sm:$0xff]
        %v1159 = vld [vmem:[#allocation11 + $0x48] sm:$0xff]
        %v1160 = vld [vmem:[#allocation11 + $0x50] sm:$0xff]
        %v1161 = vld [vmem:[#allocation11 + $0x58] sm:$0xff]
        %v1162 = vld [vmem:[#allocation11 + $0x60] sm:$0xff]
        %v1163 = vld [vmem:[#allocation11 + $0x68] sm:$0xff]
        %v1164 = vld [vmem:[#allocation11 + $0x70] sm:$0xff]
        %v1165 = vld [vmem:[#allocation11 + $0x78] sm:$0xff]
        %v1166 = vld [vmem:[#allocation13] sm:$0xff]
        %v1167 = vld [vmem:[#allocation13 + $0x8] sm:$0xff]
        %v1168 = vld [vmem:[#allocation13 + $0x10] sm:$0xff]
        %v1169 = vld [vmem:[#allocation13 + $0x18] sm:$0xff]
        %v1170 = vld [vmem:[#allocation13 + $0x20] sm:$0xff]
        %v1171 = vld [vmem:[#allocation13 + $0x28] sm:$0xff]
        %v1172 = vld [vmem:[#allocation13 + $0x30] sm:$0xff]
        %v1173 = vld [vmem:[#allocation13 + $0x38] sm:$0xff]
        %v1174 = vld [vmem:[#allocation13 + $0x40] sm:$0xff]
        %v1175 = vld [vmem:[#allocation13 + $0x48] sm:$0xff]
        %v1176 = vld [vmem:[#allocation13 + $0x50] sm:$0xff]
        %v1177 = vld [vmem:[#allocation13 + $0x58] sm:$0xff]
        %v1178 = vld [vmem:[#allocation13 + $0x60] sm:$0xff]
        %v1179 = vld [vmem:[#allocation13 + $0x68] sm:$0xff]
        %v1180 = vld [vmem:[#allocation13 + $0x70] sm:$0xff]
        %v1181 = vld [vmem:[#allocation13 + $0x78] sm:$0xff]
        %1182 = vmatpush.msra.mxu0 %v1181
        %1183 = vmatpush.msra.mxu0 %v1180
        %1184 = vmatpush.msra.mxu0 %v1179
        %1185 = vmatpush.msra.mxu0 %v1178
        %1186 = vmatpush.msra.mxu0 %v1177
        %1187 = vmatpush.msra.mxu0 %v1176
        %1188 = vmatpush.msra.mxu0 %v1175
        %1189 = vmatpush.msra.mxu0 %v1174
        %1190 = vmatpush.msra.mxu0 %v1173
        %1191 = vmatpush.msra.mxu0 %v1172
        %1192 = vmatpush.msra.mxu0 %v1171
        %1193 = vmatpush.msra.mxu0 %v1170
        %1194 = vmatpush.msra.mxu0 %v1169
        %1195 = vmatpush.msra.mxu0 %v1168
        %1196 = vmatpush.msra.mxu0 %v1167
        %1197 = vmatpush.msra.mxu0 %v1166
        %1198 = vmatmul.f32.gmra.mxu0 %v1103
        %v1199 = vpop.f32.mrf.mxu0
        %v1200 = vadd.f32 0.0, %v1199
        %1201 = vmatmul.f32.gmra.mxu0 %v1106
        %v1202 = vpop.f32.mrf.mxu0
        %v1203 = vadd.f32 0.0, %v1202
        %1204 = vmatmul.f32.gmra.mxu0 %v1109
        %v1205 = vpop.f32.mrf.mxu0
        %v1206 = vadd.f32 0.0, %v1205
        %1207 = vmatmul.f32.gmra.mxu0 %v1112
        %v1208 = vpop.f32.mrf.mxu0
        %v1209 = vadd.f32 0.0, %v1208
        %1210 = vmatmul.f32.gmra.mxu0 %v1115
        %v1211 = vpop.f32.mrf.mxu0
        %v1212 = vadd.f32 0.0, %v1211
        %1213 = vmatmul.f32.gmra.mxu0 %v1118
        %v1214 = vpop.f32.mrf.mxu0
        %v1215 = vadd.f32 0.0, %v1214
        %1216 = vmatmul.f32.gmra.mxu0 %v1121
        %v1217 = vpop.f32.mrf.mxu0
        %v1218 = vadd.f32 0.0, %v1217
        %1219 = vmatmul.f32.gmra.mxu0 %v1124
        %v1220 = vpop.f32.mrf.mxu0
        %v1221 = vadd.f32 0.0, %v1220
        %1222 = vmatmul.f32.gmra.mxu0 %v1127
        %v1223 = vpop.f32.mrf.mxu0
        %v1224 = vadd.f32 0.0, %v1223
        %1225 = vmatmul.f32.gmra.mxu0 %v1130
        %v1226 = vpop.f32.mrf.mxu0
        %v1227 = vadd.f32 0.0, %v1226
        %1228 = vmatmul.f32.gmra.mxu0 %v1133
        %v1229 = vpop.f32.mrf.mxu0
        %v1230 = vadd.f32 0.0, %v1229
        %1231 = vmatmul.f32.gmra.mxu0 %v1136
        %v1232 = vpop.f32.mrf.mxu0
        %v1233 = vadd.f32 0.0, %v1232
        %1234 = vmatmul.f32.gmra.mxu0 %v1139
        %v1235 = vpop.f32.mrf.mxu0
        %v1236 = vadd.f32 0.0, %v1235
        %1237 = vmatmul.f32.gmra.mxu0 %v1142
        %v1238 = vpop.f32.mrf.mxu0
        %v1239 = vadd.f32 0.0, %v1238
        %1240 = vmatmul.f32.gmra.mxu0 %v1145
        %v1241 = vpop.f32.mrf.mxu0
        %v1242 = vadd.f32 0.0, %v1241
        %1243 = vmatmul.f32.gmra.mxu0 %v1148
        %v1244 = vpop.f32.mrf.mxu0
        %v1245 = vadd.f32 0.0, %v1244
        %1246 = vdwg.mxu0
        %1247 = vmatpush.msra.mxu0 %v1165
        %1248 = vmatpush.msra.mxu0 %v1164
        %1249 = vmatpush.msra.mxu0 %v1163
        %1250 = vmatpush.msra.mxu0 %v1162
        %1251 = vmatpush.msra.mxu0 %v1161
        %1252 = vmatpush.msra.mxu0 %v1160
        %1253 = vmatpush.msra.mxu0 %v1159
        %1254 = vmatpush.msra.mxu0 %v1158
        %1255 = vmatpush.msra.mxu0 %v1157
        %1256 = vmatpush.msra.mxu0 %v1156
        %1257 = vmatpush.msra.mxu0 %v1155
        %1258 = vmatpush.msra.mxu0 %v1154
        %1259 = vmatpush.msra.mxu0 %v1153
        %1260 = vmatpush.msra.mxu0 %v1152
        %1261 = vmatpush.msra.mxu0 %v1151
        %1262 = vmatpush.msra.mxu0 %v1150
        %1263 = vmatmul.f32.gmra.mxu0 %v1069
        %v1264 = vpop.f32.mrf.mxu0
        %v1265 = vadd.f32 %v1200, %v1264
        %1266 = vmatmul.f32.gmra.mxu0 %v1070
        %v1267 = vpop.f32.mrf.mxu0
        %v1268 = vadd.f32 %v1203, %v1267
        %1269 = vmatmul.f32.gmra.mxu0 %v1071
        %v1270 = vpop.f32.mrf.mxu0
        %v1271 = vadd.f32 %v1206, %v1270
        %1272 = vmatmul.f32.gmra.mxu0 %v1072
        %v1273 = vpop.f32.mrf.mxu0
        %v1274 = vadd.f32 %v1209, %v1273
        %1275 = vmatmul.f32.gmra.mxu0 %v1073
        %v1276 = vpop.f32.mrf.mxu0
        %v1277 = vadd.f32 %v1212, %v1276
        %1278 = vmatmul.f32.gmra.mxu0 %v1074
        %v1279 = vpop.f32.mrf.mxu0
        %v1280 = vadd.f32 %v1215, %v1279
        %1281 = vmatmul.f32.gmra.mxu0 %v1075
        %v1282 = vpop.f32.mrf.mxu0
        %v1283 = vadd.f32 %v1218, %v1282
        %1284 = vmatmul.f32.gmra.mxu0 %v1076
        %v1285 = vpop.f32.mrf.mxu0
        %v1286 = vadd.f32 %v1221, %v1285
        %1287 = vmatmul.f32.gmra.mxu0 %v1077
        %v1288 = vpop.f32.mrf.mxu0
        %v1289 = vadd.f32 %v1224, %v1288
        %1290 = vmatmul.f32.gmra.mxu0 %v1078
        %v1291 = vpop.f32.mrf.mxu0
        %v1292 = vadd.f32 %v1227, %v1291
        %1293 = vmatmul.f32.gmra.mxu0 %v1079
        %v1294 = vpop.f32.mrf.mxu0
        %v1295 = vadd.f32 %v1230, %v1294
        %1296 = vmatmul.f32.gmra.mxu0 %v1080
        %v1297 = vpop.f32.mrf.mxu0
        %v1298 = vadd.f32 %v1233, %v1297
        %1299 = vmatmul.f32.gmra.mxu0 %v1081
        %v1300 = vpop.f32.mrf.mxu0
        %v1301 = vadd.f32 %v1236, %v1300
        %1302 = vmatmul.f32.gmra.mxu0 %v1082
        %v1303 = vpop.f32.mrf.mxu0
        %v1304 = vadd.f32 %v1239, %v1303
        %1305 = vmatmul.f32.gmra.mxu0 %v1083
        %v1306 = vpop.f32.mrf.mxu0
        %v1307 = vadd.f32 %v1242, %v1306
        %1308 = vmatmul.f32.gmra.mxu0 %v1084
        %v1309 = vpop.f32.mrf.mxu0
        %v1310 = vadd.f32 %v1245, %v1309
        %1311 = vdwg.mxu0
        %v1312 = vld [vmem:[%s9] sm:$0x1]
        %v1314 = vperm.slane %v1312, 0
        %v1316 = vadd.f32 %v1265, %v1314
        %v1317 = vadd.f32 %v1268, %v1314
        %v1318 = vadd.f32 %v1271, %v1314
        %v1319 = vadd.f32 %v1274, %v1314
        %v1320 = vadd.f32 %v1277, %v1314
        %v1321 = vadd.f32 %v1280, %v1314
        %v1322 = vadd.f32 %v1283, %v1314
        %v1323 = vadd.f32 %v1286, %v1314
        %v1324 = vadd.f32 %v1289, %v1314
        %v1325 = vadd.f32 %v1292, %v1314
        %v1326 = vadd.f32 %v1295, %v1314
        %v1327 = vadd.f32 %v1298, %v1314
        %v1328 = vadd.f32 %v1301, %v1314
        %v1329 = vadd.f32 %v1304, %v1314
        %v1330 = vadd.f32 %v1307, %v1314
        %v1331 = vadd.f32 %v1310, %v1314
        %v1332 = vmax.f32 %v1316, 0.0
        %v1333 = vmax.f32 %v1317, 0.0
        %v1334 = vmax.f32 %v1318, 0.0
        %v1335 = vmax.f32 %v1319, 0.0
        %v1336 = vmax.f32 %v1320, 0.0
        %v1337 = vmax.f32 %v1321, 0.0
        %v1338 = vmax.f32 %v1322, 0.0
        %v1339 = vmax.f32 %v1323, 0.0
        %v1340 = vmax.f32 %v1324, 0.0
        %v1341 = vmax.f32 %v1325, 0.0
        %v1342 = vmax.f32 %v1326, 0.0
        %v1343 = vmax.f32 %v1327, 0.0
        %v1344 = vmax.f32 %v1328, 0.0
        %v1345 = vmax.f32 %v1329, 0.0
        %v1346 = vmax.f32 %v1330, 0.0
        %v1347 = vmax.f32 %v1331, 0.0
        %1348 = vmatpush.msra.mxu0 %v1347
        %1349 = vmatpush.msra.mxu0 %v1346
        %1350 = vmatpush.msra.mxu0 %v1345
        %1351 = vmatpush.msra.mxu0 %v1344
        %1352 = vmatpush.msra.mxu0 %v1343
        %1353 = vmatpush.msra.mxu0 %v1342
        %1354 = vmatpush.msra.mxu0 %v1341
        %1355 = vmatpush.msra.mxu0 %v1340
        %1356 = vmatpush.msra.mxu0 %v1339
        %1357 = vmatpush.msra.mxu0 %v1338
        %1358 = vmatpush.msra.mxu0 %v1337
        %1359 = vmatpush.msra.mxu0 %v1336
        %1360 = vmatpush.msra.mxu0 %v1335
        %1361 = vmatpush.msra.mxu0 %v1334
        %1362 = vmatpush.msra.mxu0 %v1333
        %1363 = vmatpush.msra.mxu0 %v1332
        %1364 = vmatmul.f32.gmra.mxu0 %v705
        %v1365 = vpop.f32.mrf.mxu0
        %v1366 = vadd.f32 0.0, %v1365
        %1367 = vmatmul.f32.gmra.mxu0 %v706
        %v1368 = vpop.f32.mrf.mxu0
        %v1369 = vadd.f32 0.0, %v1368
        %1370 = vmatmul.f32.gmra.mxu0 %v707
        %v1371 = vpop.f32.mrf.mxu0
        %v1372 = vadd.f32 0.0, %v1371
        %1373 = vmatmul.f32.gmra.mxu0 %v708
        %v1374 = vpop.f32.mrf.mxu0
        %v1375 = vadd.f32 0.0, %v1374
        %1376 = vmatmul.f32.gmra.mxu0 %v709
        %v1377 = vpop.f32.mrf.mxu0
        %v1378 = vadd.f32 0.0, %v1377
        %1379 = vmatmul.f32.gmra.mxu0 %v710
        %v1380 = vpop.f32.mrf.mxu0
        %v1381 = vadd.f32 0.0, %v1380
        %1382 = vmatmul.f32.gmra.mxu0 %v711
        %v1383 = vpop.f32.mrf.mxu0
        %v1384 = vadd.f32 0.0, %v1383
        %1385 = vmatmul.f32.gmra.mxu0 %v712
        %v1386 = vpop.f32.mrf.mxu0
        %v1387 = vadd.f32 0.0, %v1386
        %1388 = vmatmul.f32.gmra.mxu0 %v713
        %v1389 = vpop.f32.mrf.mxu0
        %v1390 = vadd.f32 0.0, %v1389
        %1391 = vmatmul.f32.gmra.mxu0 %v714
        %v1392 = vpop.f32.mrf.mxu0
        %v1393 = vadd.f32 0.0, %v1392
        %1394 = vmatmul.f32.gmra.mxu0 %v715
        %v1395 = vpop.f32.mrf.mxu0
        %v1396 = vadd.f32 0.0, %v1395
        %1397 = vmatmul.f32.gmra.mxu0 %v716
        %v1398 = vpop.f32.mrf.mxu0
        %v1399 = vadd.f32 0.0, %v1398
        %1400 = vmatmul.f32.gmra.mxu0 %v717
        %v1401 = vpop.f32.mrf.mxu0
        %v1402 = vadd.f32 0.0, %v1401
        %1403 = vmatmul.f32.gmra.mxu0 %v718
        %v1404 = vpop.f32.mrf.mxu0
        %v1405 = vadd.f32 0.0, %v1404
        %1406 = vmatmul.f32.gmra.mxu0 %v719
        %v1407 = vpop.f32.mrf.mxu0
        %v1408 = vadd.f32 0.0, %v1407
        %1409 = vmatmul.f32.gmra.mxu0 %v720
        %v1410 = vpop.f32.mrf.mxu0
        %v1411 = vadd.f32 0.0, %v1410
        %1412 = vdwg.mxu0
        %v1413 = vld [vmem:[#allocation14] sm:$0xff]
        %v1414 = vld [vmem:[#allocation14 + $0x8] sm:$0xff]
        %v1415 = vld [vmem:[#allocation14 + $0x10] sm:$0xff]
        %v1416 = vld [vmem:[#allocation14 + $0x18] sm:$0xff]
        %v1417 = vld [vmem:[#allocation14 + $0x20] sm:$0xff]
        %v1418 = vld [vmem:[#allocation14 + $0x28] sm:$0xff]
        %v1419 = vld [vmem:[#allocation14 + $0x30] sm:$0xff]
        %v1420 = vld [vmem:[#allocation14 + $0x38] sm:$0xff]
        %v1421 = vld [vmem:[#allocation14 + $0x40] sm:$0xff]
        %v1422 = vld [vmem:[#allocation14 + $0x48] sm:$0xff]
        %v1423 = vld [vmem:[#allocation14 + $0x50] sm:$0xff]
        %v1424 = vld [vmem:[#allocation14 + $0x58] sm:$0xff]
        %v1425 = vld [vmem:[#allocation14 + $0x60] sm:$0xff]
        %v1426 = vld [vmem:[#allocation14 + $0x68] sm:$0xff]
        %v1427 = vld [vmem:[#allocation14 + $0x70] sm:$0xff]
        %v1428 = vld [vmem:[#allocation14 + $0x78] sm:$0xff]
        %v1429 = vld [vmem:[#allocation16] sm:$0xff]
        %v1430 = vld [vmem:[#allocation16 + $0x8] sm:$0xff]
        %v1431 = vld [vmem:[#allocation16 + $0x10] sm:$0xff]
        %v1432 = vld [vmem:[#allocation16 + $0x18] sm:$0xff]
        %v1433 = vld [vmem:[#allocation16 + $0x20] sm:$0xff]
        %v1434 = vld [vmem:[#allocation16 + $0x28] sm:$0xff]
        %v1435 = vld [vmem:[#allocation16 + $0x30] sm:$0xff]
        %v1436 = vld [vmem:[#allocation16 + $0x38] sm:$0xff]
        %v1437 = vld [vmem:[#allocation16 + $0x40] sm:$0xff]
        %v1438 = vld [vmem:[#allocation16 + $0x48] sm:$0xff]
        %v1439 = vld [vmem:[#allocation16 + $0x50] sm:$0xff]
        %v1440 = vld [vmem:[#allocation16 + $0x58] sm:$0xff]
        %v1441 = vld [vmem:[#allocation16 + $0x60] sm:$0xff]
        %v1442 = vld [vmem:[#allocation16 + $0x68] sm:$0xff]
        %v1443 = vld [vmem:[#allocation16 + $0x70] sm:$0xff]
        %v1444 = vld [vmem:[#allocation16 + $0x78] sm:$0xff]
        %1445 = vmatpush.msra.mxu0 %v1444
        %1446 = vmatpush.msra.mxu0 %v1443
        %1447 = vmatpush.msra.mxu0 %v1442
        %1448 = vmatpush.msra.mxu0 %v1441
        %1449 = vmatpush.msra.mxu0 %v1440
        %1450 = vmatpush.msra.mxu0 %v1439
        %1451 = vmatpush.msra.mxu0 %v1438
        %1452 = vmatpush.msra.mxu0 %v1437
        %1453 = vmatpush.msra.mxu0 %v1436
        %1454 = vmatpush.msra.mxu0 %v1435
        %1455 = vmatpush.msra.mxu0 %v1434
        %1456 = vmatpush.msra.mxu0 %v1433
        %1457 = vmatpush.msra.mxu0 %v1432
        %1458 = vmatpush.msra.mxu0 %v1431
        %1459 = vmatpush.msra.mxu0 %v1430
        %1460 = vmatpush.msra.mxu0 %v1429
        %1461 = vmatmul.f32.gmra.mxu0 %v1366
        %v1462 = vpop.f32.mrf.mxu0
        %v1463 = vadd.f32 0.0, %v1462
        %1464 = vmatmul.f32.gmra.mxu0 %v1369
        %v1465 = vpop.f32.mrf.mxu0
        %v1466 = vadd.f32 0.0, %v1465
        %1467 = vmatmul.f32.gmra.mxu0 %v1372
        %v1468 = vpop.f32.mrf.mxu0
        %v1469 = vadd.f32 0.0, %v1468
        %1470 = vmatmul.f32.gmra.mxu0 %v1375
        %v1471 = vpop.f32.mrf.mxu0
        %v1472 = vadd.f32 0.0, %v1471
        %1473 = vmatmul.f32.gmra.mxu0 %v1378
        %v1474 = vpop.f32.mrf.mxu0
        %v1475 = vadd.f32 0.0, %v1474
        %1476 = vmatmul.f32.gmra.mxu0 %v1381
        %v1477 = vpop.f32.mrf.mxu0
        %v1478 = vadd.f32 0.0, %v1477
        %1479 = vmatmul.f32.gmra.mxu0 %v1384
        %v1480 = vpop.f32.mrf.mxu0
        %v1481 = vadd.f32 0.0, %v1480
        %1482 = vmatmul.f32.gmra.mxu0 %v1387
        %v1483 = vpop.f32.mrf.mxu0
        %v1484 = vadd.f32 0.0, %v1483
        %1485 = vmatmul.f32.gmra.mxu0 %v1390
        %v1486 = vpop.f32.mrf.mxu0
        %v1487 = vadd.f32 0.0, %v1486
        %1488 = vmatmul.f32.gmra.mxu0 %v1393
        %v1489 = vpop.f32.mrf.mxu0
        %v1490 = vadd.f32 0.0, %v1489
        %1491 = vmatmul.f32.gmra.mxu0 %v1396
        %v1492 = vpop.f32.mrf.mxu0
        %v1493 = vadd.f32 0.0, %v1492
        %1494 = vmatmul.f32.gmra.mxu0 %v1399
        %v1495 = vpop.f32.mrf.mxu0
        %v1496 = vadd.f32 0.0, %v1495
        %1497 = vmatmul.f32.gmra.mxu0 %v1402
        %v1498 = vpop.f32.mrf.mxu0
        %v1499 = vadd.f32 0.0, %v1498
        %1500 = vmatmul.f32.gmra.mxu0 %v1405
        %v1501 = vpop.f32.mrf.mxu0
        %v1502 = vadd.f32 0.0, %v1501
        %1503 = vmatmul.f32.gmra.mxu0 %v1408
        %v1504 = vpop.f32.mrf.mxu0
        %v1505 = vadd.f32 0.0, %v1504
        %1506 = vmatmul.f32.gmra.mxu0 %v1411
        %v1507 = vpop.f32.mrf.mxu0
        %v1508 = vadd.f32 0.0, %v1507
        %1509 = vdwg.mxu0
        %1510 = vmatpush.msra.mxu0 %v1428
        %1511 = vmatpush.msra.mxu0 %v1427
        %1512 = vmatpush.msra.mxu0 %v1426
        %1513 = vmatpush.msra.mxu0 %v1425
        %1514 = vmatpush.msra.mxu0 %v1424
        %1515 = vmatpush.msra.mxu0 %v1423
        %1516 = vmatpush.msra.mxu0 %v1422
        %1517 = vmatpush.msra.mxu0 %v1421
        %1518 = vmatpush.msra.mxu0 %v1420
        %1519 = vmatpush.msra.mxu0 %v1419
        %1520 = vmatpush.msra.mxu0 %v1418
        %1521 = vmatpush.msra.mxu0 %v1417
        %1522 = vmatpush.msra.mxu0 %v1416
        %1523 = vmatpush.msra.mxu0 %v1415
        %1524 = vmatpush.msra.mxu0 %v1414
        %1525 = vmatpush.msra.mxu0 %v1413
        %1526 = vmatmul.f32.gmra.mxu0 %v1332
        %v1527 = vpop.f32.mrf.mxu0
        %v1528 = vadd.f32 %v1463, %v1527
        %1529 = vmatmul.f32.gmra.mxu0 %v1333
        %v1530 = vpop.f32.mrf.mxu0
        %v1531 = vadd.f32 %v1466, %v1530
        %1532 = vmatmul.f32.gmra.mxu0 %v1334
        %v1533 = vpop.f32.mrf.mxu0
        %v1534 = vadd.f32 %v1469, %v1533
        %1535 = vmatmul.f32.gmra.mxu0 %v1335
        %v1536 = vpop.f32.mrf.mxu0
        %v1537 = vadd.f32 %v1472, %v1536
        %1538 = vmatmul.f32.gmra.mxu0 %v1336
        %v1539 = vpop.f32.mrf.mxu0
        %v1540 = vadd.f32 %v1475, %v1539
        %1541 = vmatmul.f32.gmra.mxu0 %v1337
        %v1542 = vpop.f32.mrf.mxu0
        %v1543 = vadd.f32 %v1478, %v1542
        %1544 = vmatmul.f32.gmra.mxu0 %v1338
        %v1545 = vpop.f32.mrf.mxu0
        %v1546 = vadd.f32 %v1481, %v1545
        %1547 = vmatmul.f32.gmra.mxu0 %v1339
        %v1548 = vpop.f32.mrf.mxu0
        %v1549 = vadd.f32 %v1484, %v1548
        %1550 = vmatmul.f32.gmra.mxu0 %v1340
        %v1551 = vpop.f32.mrf.mxu0
        %v1552 = vadd.f32 %v1487, %v1551
        %1553 = vmatmul.f32.gmra.mxu0 %v1341
        %v1554 = vpop.f32.mrf.mxu0
        %v1555 = vadd.f32 %v1490, %v1554
        %1556 = vmatmul.f32.gmra.mxu0 %v1342
        %v1557 = vpop.f32.mrf.mxu0
        %v1558 = vadd.f32 %v1493, %v1557
        %1559 = vmatmul.f32.gmra.mxu0 %v1343
        %v1560 = vpop.f32.mrf.mxu0
        %v1561 = vadd.f32 %v1496, %v1560
        %1562 = vmatmul.f32.gmra.mxu0 %v1344
        %v1563 = vpop.f32.mrf.mxu0
        %v1564 = vadd.f32 %v1499, %v1563
        %1565 = vmatmul.f32.gmra.mxu0 %v1345
        %v1566 = vpop.f32.mrf.mxu0
        %v1567 = vadd.f32 %v1502, %v1566
        %1568 = vmatmul.f32.gmra.mxu0 %v1346
        %v1569 = vpop.f32.mrf.mxu0
        %v1570 = vadd.f32 %v1505, %v1569
        %1571 = vmatmul.f32.gmra.mxu0 %v1347
        %v1572 = vpop.f32.mrf.mxu0
        %v1573 = vadd.f32 %v1508, %v1572
        %1574 = vdwg.mxu0
        %v1575 = vld [vmem:[%s12] sm:$0x1]
        %v1577 = vperm.slane %v1575, 0
        %v1579 = vadd.f32 %v1528, %v1577
        %v1580 = vadd.f32 %v1531, %v1577
        %v1581 = vadd.f32 %v1534, %v1577
        %v1582 = vadd.f32 %v1537, %v1577
        %v1583 = vadd.f32 %v1540, %v1577
        %v1584 = vadd.f32 %v1543, %v1577
        %v1585 = vadd.f32 %v1546, %v1577
        %v1586 = vadd.f32 %v1549, %v1577
        %v1587 = vadd.f32 %v1552, %v1577
        %v1588 = vadd.f32 %v1555, %v1577
        %v1589 = vadd.f32 %v1558, %v1577
        %v1590 = vadd.f32 %v1561, %v1577
        %v1591 = vadd.f32 %v1564, %v1577
        %v1592 = vadd.f32 %v1567, %v1577
        %v1593 = vadd.f32 %v1570, %v1577
        %v1594 = vadd.f32 %v1573, %v1577
        %v1595 = vmax.f32 %v1579, 0.0
        %v1596 = vmax.f32 %v1580, 0.0
        %v1597 = vmax.f32 %v1581, 0.0
        %v1598 = vmax.f32 %v1582, 0.0
        %v1599 = vmax.f32 %v1583, 0.0
        %v1600 = vmax.f32 %v1584, 0.0
        %v1601 = vmax.f32 %v1585, 0.0
        %v1602 = vmax.f32 %v1586, 0.0
        %v1603 = vmax.f32 %v1587, 0.0
        %v1604 = vmax.f32 %v1588, 0.0
        %v1605 = vmax.f32 %v1589, 0.0
        %v1606 = vmax.f32 %v1590, 0.0
        %v1607 = vmax.f32 %v1591, 0.0
        %v1608 = vmax.f32 %v1592, 0.0
        %v1609 = vmax.f32 %v1593, 0.0
        %v1610 = vmax.f32 %v1594, 0.0
        %v1611 = vld [vmem:[#allocation17] sm:$0xff]
        %v1612 = vld [vmem:[#allocation17 + $0x8] sm:$0xff]
        %v1613 = vld [vmem:[#allocation17 + $0x10] sm:$0xff]
        %v1614 = vld [vmem:[#allocation17 + $0x18] sm:$0xff]
        %v1615 = vld [vmem:[#allocation17 + $0x20] sm:$0xff]
        %v1616 = vld [vmem:[#allocation17 + $0x28] sm:$0xff]
        %v1617 = vld [vmem:[#allocation17 + $0x30] sm:$0xff]
        %v1618 = vld [vmem:[#allocation17 + $0x38] sm:$0xff]
        %v1619 = vld [vmem:[#allocation17 + $0x40] sm:$0xff]
        %v1620 = vld [vmem:[#allocation17 + $0x48] sm:$0xff]
        %v1621 = vld [vmem:[#allocation17 + $0x50] sm:$0xff]
        %v1622 = vld [vmem:[#allocation17 + $0x58] sm:$0xff]
        %v1623 = vld [vmem:[#allocation17 + $0x60] sm:$0xff]
        %v1624 = vld [vmem:[#allocation17 + $0x68] sm:$0xff]
        %v1625 = vld [vmem:[#allocation17 + $0x70] sm:$0xff]
        %v1626 = vld [vmem:[#allocation17 + $0x78] sm:$0xff]
        %v1627 = vld [vmem:[%s14] sm:$0x1]
        %v1629 = vperm.slane %v1627, 0
        %1631 = vmatpush.msra.mxu0 %v1626
        %1632 = vmatpush.msra.mxu0 %v1625
        %1633 = vmatpush.msra.mxu0 %v1624
        %1634 = vmatpush.msra.mxu0 %v1623
        %1635 = vmatpush.msra.mxu0 %v1622
        %1636 = vmatpush.msra.mxu0 %v1621
        %1637 = vmatpush.msra.mxu0 %v1620
        %1638 = vmatpush.msra.mxu0 %v1619
        %1639 = vmatpush.msra.mxu0 %v1618
        %1640 = vmatpush.msra.mxu0 %v1617
        %1641 = vmatpush.msra.mxu0 %v1616
        %1642 = vmatpush.msra.mxu0 %v1615
        %1643 = vmatpush.msra.mxu0 %v1614
        %1644 = vmatpush.msra.mxu0 %v1613
        %1645 = vmatpush.msra.mxu0 %v1612
        %1646 = vmatpush.msra.mxu0 %v1611
        %1647 = vmatmul.f32.gmra.mxu0 %v1595
        %v1648 = vpop.f32.mrf.mxu0
        %v1649 = vadd.f32 %v1629, %v1648
        %1650 = vmatmul.f32.gmra.mxu0 %v1596
        %v1651 = vpop.f32.mrf.mxu0
        %v1652 = vadd.f32 %v1629, %v1651
        %1653 = vmatmul.f32.gmra.mxu0 %v1597
        %v1654 = vpop.f32.mrf.mxu0
        %v1655 = vadd.f32 %v1629, %v1654
        %1656 = vmatmul.f32.gmra.mxu0 %v1598
        %v1657 = vpop.f32.mrf.mxu0
        %v1658 = vadd.f32 %v1629, %v1657
        %1659 = vmatmul.f32.gmra.mxu0 %v1599
        %v1660 = vpop.f32.mrf.mxu0
        %v1661 = vadd.f32 %v1629, %v1660
        %1662 = vmatmul.f32.gmra.mxu0 %v1600
        %v1663 = vpop.f32.mrf.mxu0
        %v1664 = vadd.f32 %v1629, %v1663
        %1665 = vmatmul.f32.gmra.mxu0 %v1601
        %v1666 = vpop.f32.mrf.mxu0
        %v1667 = vadd.f32 %v1629, %v1666
        %1668 = vmatmul.f32.gmra.mxu0 %v1602
        %v1669 = vpop.f32.mrf.mxu0
        %v1670 = vadd.f32 %v1629, %v1669
        %1671 = vmatmul.f32.gmra.mxu0 %v1603
        %v1672 = vpop.f32.mrf.mxu0
        %v1673 = vadd.f32 %v1629, %v1672
        %1674 = vmatmul.f32.gmra.mxu0 %v1604
        %v1675 = vpop.f32.mrf.mxu0
        %v1676 = vadd.f32 %v1629, %v1675
        %1677 = vmatmul.f32.gmra.mxu0 %v1605
        %v1678 = vpop.f32.mrf.mxu0
        %v1679 = vadd.f32 %v1629, %v1678
        %1680 = vmatmul.f32.gmra.mxu0 %v1606
        %v1681 = vpop.f32.mrf.mxu0
        %v1682 = vadd.f32 %v1629, %v1681
        %1683 = vmatmul.f32.gmra.mxu0 %v1607
        %v1684 = vpop.f32.mrf.mxu0
        %v1685 = vadd.f32 %v1629, %v1684
        %1686 = vmatmul.f32.gmra.mxu0 %v1608
        %v1687 = vpop.f32.mrf.mxu0
        %v1688 = vadd.f32 %v1629, %v1687
        %1689 = vmatmul.f32.gmra.mxu0 %v1609
        %v1690 = vpop.f32.mrf.mxu0
        %v1691 = vadd.f32 %v1629, %v1690
        %1692 = vmatmul.f32.gmra.mxu0 %v1610
        %v1693 = vpop.f32.mrf.mxu0
        %v1694 = vadd.f32 %v1629, %v1693
        %1695 = vdwg.mxu0
        %v1696 = vxor.u32 %v1649, 2147483648
        %v1697 = vxor.u32 %v1652, 2147483648
        %v1698 = vxor.u32 %v1655, 2147483648
        %v1699 = vxor.u32 %v1658, 2147483648
        %v1700 = vxor.u32 %v1661, 2147483648
        %v1701 = vxor.u32 %v1664, 2147483648
        %v1702 = vxor.u32 %v1667, 2147483648
        %v1703 = vxor.u32 %v1670, 2147483648
        %v1704 = vxor.u32 %v1673, 2147483648
        %v1705 = vxor.u32 %v1676, 2147483648
        %v1706 = vxor.u32 %v1679, 2147483648
        %v1707 = vxor.u32 %v1682, 2147483648
        %v1708 = vxor.u32 %v1685, 2147483648
        %v1709 = vxor.u32 %v1688, 2147483648
        %v1710 = vxor.u32 %v1691, 2147483648
        %v1711 = vxor.u32 %v1694, 2147483648
        %v1712 = vmul.f32 %v1696, 1.442695
        %v1713 = vpow.pop %v1712
        %v1714 = vmul.f32 %v1697, 1.442695
        %v1715 = vpow.pop %v1714
        %v1716 = vmul.f32 %v1698, 1.442695
        %v1717 = vpow.pop %v1716
        %v1718 = vmul.f32 %v1699, 1.442695
        %v1719 = vpow.pop %v1718
        %v1720 = vmul.f32 %v1700, 1.442695
        %v1721 = vpow.pop %v1720
        %v1722 = vmul.f32 %v1701, 1.442695
        %v1723 = vpow.pop %v1722
        %v1724 = vmul.f32 %v1702, 1.442695
        %v1725 = vpow.pop %v1724
        %v1726 = vmul.f32 %v1703, 1.442695
        %v1727 = vpow.pop %v1726
        %v1728 = vmul.f32 %v1704, 1.442695
        %v1729 = vpow.pop %v1728
        %v1730 = vmul.f32 %v1705, 1.442695
        %v1731 = vpow.pop %v1730
        %v1732 = vmul.f32 %v1706, 1.442695
        %v1733 = vpow.pop %v1732
        %v1734 = vmul.f32 %v1707, 1.442695
        %v1735 = vpow.pop %v1734
        %v1736 = vmul.f32 %v1708, 1.442695
        %v1737 = vpow.pop %v1736
        %v1738 = vmul.f32 %v1709, 1.442695
        %v1739 = vpow.pop %v1738
        %v1740 = vmul.f32 %v1710, 1.442695
        %v1741 = vpow.pop %v1740
        %v1742 = vmul.f32 %v1711, 1.442695
        %v1743 = vpow.pop %v1742
        %v1744 = vadd.f32 %v1713, 1.0
        %v1745 = vadd.f32 %v1715, 1.0
        %v1746 = vadd.f32 %v1717, 1.0
        %v1747 = vadd.f32 %v1719, 1.0
        %v1748 = vadd.f32 %v1721, 1.0
        %v1749 = vadd.f32 %v1723, 1.0
        %v1750 = vadd.f32 %v1725, 1.0
        %v1751 = vadd.f32 %v1727, 1.0
        %v1752 = vadd.f32 %v1729, 1.0
        %v1753 = vadd.f32 %v1731, 1.0
        %v1754 = vadd.f32 %v1733, 1.0
        %v1755 = vadd.f32 %v1735, 1.0
        %v1756 = vadd.f32 %v1737, 1.0
        %v1757 = vadd.f32 %v1739, 1.0
        %v1758 = vadd.f32 %v1741, 1.0
        %v1759 = vadd.f32 %v1743, 1.0
        %v1760 = vrcp.pop %v1744
        %v1761 = vmul.f32 %v1744, %v1760
        %v1762 = vsub.f32 1.0, %v1761
        %v1763 = vmul.f32 %v1760, %v1762
        %v1764 = vadd.f32 %v1760, %v1763
        %vm1765 = vweird.f32 %v1744
        %vm1766 = vweird.f32 %v1760
        %vm1767 = vmor %vm1765, %vm1766
        %v1768 = vsel %vm1767, %v1760, %v1764
        %v1769 = vand.u32 2147483647, %v1744
        %vm1770 = vcmp.eq.f32.partialorder %v1769, 8.507059e+37
        %v1771 = vand.u32 %v1744, 2147483648
        %v1772 = vor.u32 1.1754944e-38, %v1771
        %v1773 = vsel %vm1770, %v1772, %v1768
        %v1774 = vmul.f32 1.0, %v1773
        %v1775 = vrcp.pop %v1745
        %v1776 = vmul.f32 %v1745, %v1775
        %v1777 = vsub.f32 1.0, %v1776
        %v1778 = vmul.f32 %v1775, %v1777
        %v1779 = vadd.f32 %v1775, %v1778
        %vm1780 = vweird.f32 %v1745
        %vm1781 = vweird.f32 %v1775
        %vm1782 = vmor %vm1780, %vm1781
        %v1783 = vsel %vm1782, %v1775, %v1779
        %v1784 = vand.u32 2147483647, %v1745
        %vm1785 = vcmp.eq.f32.partialorder %v1784, 8.507059e+37
        %v1786 = vand.u32 %v1745, 2147483648
        %v1787 = vor.u32 1.1754944e-38, %v1786
        %v1788 = vsel %vm1785, %v1787, %v1783
        %v1789 = vmul.f32 1.0, %v1788
        %v1790 = vrcp.pop %v1746
        %v1791 = vmul.f32 %v1746, %v1790
        %v1792 = vsub.f32 1.0, %v1791
        %v1793 = vmul.f32 %v1790, %v1792
        %v1794 = vadd.f32 %v1790, %v1793
        %vm1795 = vweird.f32 %v1746
        %vm1796 = vweird.f32 %v1790
        %vm1797 = vmor %vm1795, %vm1796
        %v1798 = vsel %vm1797, %v1790, %v1794
        %v1799 = vand.u32 2147483647, %v1746
        %vm1800 = vcmp.eq.f32.partialorder %v1799, 8.507059e+37
        %v1801 = vand.u32 %v1746, 2147483648
        %v1802 = vor.u32 1.1754944e-38, %v1801
        %v1803 = vsel %vm1800, %v1802, %v1798
        %v1804 = vmul.f32 1.0, %v1803
        %v1805 = vrcp.pop %v1747
        %v1806 = vmul.f32 %v1747, %v1805
        %v1807 = vsub.f32 1.0, %v1806
        %v1808 = vmul.f32 %v1805, %v1807
        %v1809 = vadd.f32 %v1805, %v1808
        %vm1810 = vweird.f32 %v1747
        %vm1811 = vweird.f32 %v1805
        %vm1812 = vmor %vm1810, %vm1811
        %v1813 = vsel %vm1812, %v1805, %v1809
        %v1814 = vand.u32 2147483647, %v1747
        %vm1815 = vcmp.eq.f32.partialorder %v1814, 8.507059e+37
        %v1816 = vand.u32 %v1747, 2147483648
        %v1817 = vor.u32 1.1754944e-38, %v1816
        %v1818 = vsel %vm1815, %v1817, %v1813
        %v1819 = vmul.f32 1.0, %v1818
        %v1820 = vrcp.pop %v1748
        %v1821 = vmul.f32 %v1748, %v1820
        %v1822 = vsub.f32 1.0, %v1821
        %v1823 = vmul.f32 %v1820, %v1822
        %v1824 = vadd.f32 %v1820, %v1823
        %vm1825 = vweird.f32 %v1748
        %vm1826 = vweird.f32 %v1820
        %vm1827 = vmor %vm1825, %vm1826
        %v1828 = vsel %vm1827, %v1820, %v1824
        %v1829 = vand.u32 2147483647, %v1748
        %vm1830 = vcmp.eq.f32.partialorder %v1829, 8.507059e+37
        %v1831 = vand.u32 %v1748, 2147483648
        %v1832 = vor.u32 1.1754944e-38, %v1831
        %v1833 = vsel %vm1830, %v1832, %v1828
        %v1834 = vmul.f32 1.0, %v1833
        %v1835 = vrcp.pop %v1749
        %v1836 = vmul.f32 %v1749, %v1835
        %v1837 = vsub.f32 1.0, %v1836
        %v1838 = vmul.f32 %v1835, %v1837
        %v1839 = vadd.f32 %v1835, %v1838
        %vm1840 = vweird.f32 %v1749
        %vm1841 = vweird.f32 %v1835
        %vm1842 = vmor %vm1840, %vm1841
        %v1843 = vsel %vm1842, %v1835, %v1839
        %v1844 = vand.u32 2147483647, %v1749
        %vm1845 = vcmp.eq.f32.partialorder %v1844, 8.507059e+37
        %v1846 = vand.u32 %v1749, 2147483648
        %v1847 = vor.u32 1.1754944e-38, %v1846
        %v1848 = vsel %vm1845, %v1847, %v1843
        %v1849 = vmul.f32 1.0, %v1848
        %v1850 = vrcp.pop %v1750
        %v1851 = vmul.f32 %v1750, %v1850
        %v1852 = vsub.f32 1.0, %v1851
        %v1853 = vmul.f32 %v1850, %v1852
        %v1854 = vadd.f32 %v1850, %v1853
        %vm1855 = vweird.f32 %v1750
        %vm1856 = vweird.f32 %v1850
        %vm1857 = vmor %vm1855, %vm1856
        %v1858 = vsel %vm1857, %v1850, %v1854
        %v1859 = vand.u32 2147483647, %v1750
        %vm1860 = vcmp.eq.f32.partialorder %v1859, 8.507059e+37
        %v1861 = vand.u32 %v1750, 2147483648
        %v1862 = vor.u32 1.1754944e-38, %v1861
        %v1863 = vsel %vm1860, %v1862, %v1858
        %v1864 = vmul.f32 1.0, %v1863
        %v1865 = vrcp.pop %v1751
        %v1866 = vmul.f32 %v1751, %v1865
        %v1867 = vsub.f32 1.0, %v1866
        %v1868 = vmul.f32 %v1865, %v1867
        %v1869 = vadd.f32 %v1865, %v1868
        %vm1870 = vweird.f32 %v1751
        %vm1871 = vweird.f32 %v1865
        %vm1872 = vmor %vm1870, %vm1871
        %v1873 = vsel %vm1872, %v1865, %v1869
        %v1874 = vand.u32 2147483647, %v1751
        %vm1875 = vcmp.eq.f32.partialorder %v1874, 8.507059e+37
        %v1876 = vand.u32 %v1751, 2147483648
        %v1877 = vor.u32 1.1754944e-38, %v1876
        %v1878 = vsel %vm1875, %v1877, %v1873
        %v1879 = vmul.f32 1.0, %v1878
        %v1880 = vrcp.pop %v1752
        %v1881 = vmul.f32 %v1752, %v1880
        %v1882 = vsub.f32 1.0, %v1881
        %v1883 = vmul.f32 %v1880, %v1882
        %v1884 = vadd.f32 %v1880, %v1883
        %vm1885 = vweird.f32 %v1752
        %vm1886 = vweird.f32 %v1880
        %vm1887 = vmor %vm1885, %vm1886
        %v1888 = vsel %vm1887, %v1880, %v1884
        %v1889 = vand.u32 2147483647, %v1752
        %vm1890 = vcmp.eq.f32.partialorder %v1889, 8.507059e+37
        %v1891 = vand.u32 %v1752, 2147483648
        %v1892 = vor.u32 1.1754944e-38, %v1891
        %v1893 = vsel %vm1890, %v1892, %v1888
        %v1894 = vmul.f32 1.0, %v1893
        %v1895 = vrcp.pop %v1753
        %v1896 = vmul.f32 %v1753, %v1895
        %v1897 = vsub.f32 1.0, %v1896
        %v1898 = vmul.f32 %v1895, %v1897
        %v1899 = vadd.f32 %v1895, %v1898
        %vm1900 = vweird.f32 %v1753
        %vm1901 = vweird.f32 %v1895
        %vm1902 = vmor %vm1900, %vm1901
        %v1903 = vsel %vm1902, %v1895, %v1899
        %v1904 = vand.u32 2147483647, %v1753
        %vm1905 = vcmp.eq.f32.partialorder %v1904, 8.507059e+37
        %v1906 = vand.u32 %v1753, 2147483648
        %v1907 = vor.u32 1.1754944e-38, %v1906
        %v1908 = vsel %vm1905, %v1907, %v1903
        %v1909 = vmul.f32 1.0, %v1908
        %v1910 = vrcp.pop %v1754
        %v1911 = vmul.f32 %v1754, %v1910
        %v1912 = vsub.f32 1.0, %v1911
        %v1913 = vmul.f32 %v1910, %v1912
        %v1914 = vadd.f32 %v1910, %v1913
        %vm1915 = vweird.f32 %v1754
        %vm1916 = vweird.f32 %v1910
        %vm1917 = vmor %vm1915, %vm1916
        %v1918 = vsel %vm1917, %v1910, %v1914
        %v1919 = vand.u32 2147483647, %v1754
        %vm1920 = vcmp.eq.f32.partialorder %v1919, 8.507059e+37
        %v1921 = vand.u32 %v1754, 2147483648
        %v1922 = vor.u32 1.1754944e-38, %v1921
        %v1923 = vsel %vm1920, %v1922, %v1918
        %v1924 = vmul.f32 1.0, %v1923
        %v1925 = vrcp.pop %v1755
        %v1926 = vmul.f32 %v1755, %v1925
        %v1927 = vsub.f32 1.0, %v1926
        %v1928 = vmul.f32 %v1925, %v1927
        %v1929 = vadd.f32 %v1925, %v1928
        %vm1930 = vweird.f32 %v1755
        %vm1931 = vweird.f32 %v1925
        %vm1932 = vmor %vm1930, %vm1931
        %v1933 = vsel %vm1932, %v1925, %v1929
        %v1934 = vand.u32 2147483647, %v1755
        %vm1935 = vcmp.eq.f32.partialorder %v1934, 8.507059e+37
        %v1936 = vand.u32 %v1755, 2147483648
        %v1937 = vor.u32 1.1754944e-38, %v1936
        %v1938 = vsel %vm1935, %v1937, %v1933
        %v1939 = vmul.f32 1.0, %v1938
        %v1940 = vrcp.pop %v1756
        %v1941 = vmul.f32 %v1756, %v1940
        %v1942 = vsub.f32 1.0, %v1941
        %v1943 = vmul.f32 %v1940, %v1942
        %v1944 = vadd.f32 %v1940, %v1943
        %vm1945 = vweird.f32 %v1756
        %vm1946 = vweird.f32 %v1940
        %vm1947 = vmor %vm1945, %vm1946
        %v1948 = vsel %vm1947, %v1940, %v1944
        %v1949 = vand.u32 2147483647, %v1756
        %vm1950 = vcmp.eq.f32.partialorder %v1949, 8.507059e+37
        %v1951 = vand.u32 %v1756, 2147483648
        %v1952 = vor.u32 1.1754944e-38, %v1951
        %v1953 = vsel %vm1950, %v1952, %v1948
        %v1954 = vmul.f32 1.0, %v1953
        %v1955 = vrcp.pop %v1757
        %v1956 = vmul.f32 %v1757, %v1955
        %v1957 = vsub.f32 1.0, %v1956
        %v1958 = vmul.f32 %v1955, %v1957
        %v1959 = vadd.f32 %v1955, %v1958
        %vm1960 = vweird.f32 %v1757
        %vm1961 = vweird.f32 %v1955
        %vm1962 = vmor %vm1960, %vm1961
        %v1963 = vsel %vm1962, %v1955, %v1959
        %v1964 = vand.u32 2147483647, %v1757
        %vm1965 = vcmp.eq.f32.partialorder %v1964, 8.507059e+37
        %v1966 = vand.u32 %v1757, 2147483648
        %v1967 = vor.u32 1.1754944e-38, %v1966
        %v1968 = vsel %vm1965, %v1967, %v1963
        %v1969 = vmul.f32 1.0, %v1968
        %v1970 = vrcp.pop %v1758
        %v1971 = vmul.f32 %v1758, %v1970
        %v1972 = vsub.f32 1.0, %v1971
        %v1973 = vmul.f32 %v1970, %v1972
        %v1974 = vadd.f32 %v1970, %v1973
        %vm1975 = vweird.f32 %v1758
        %vm1976 = vweird.f32 %v1970
        %vm1977 = vmor %vm1975, %vm1976
        %v1978 = vsel %vm1977, %v1970, %v1974
        %v1979 = vand.u32 2147483647, %v1758
        %vm1980 = vcmp.eq.f32.partialorder %v1979, 8.507059e+37
        %v1981 = vand.u32 %v1758, 2147483648
        %v1982 = vor.u32 1.1754944e-38, %v1981
        %v1983 = vsel %vm1980, %v1982, %v1978
        %v1984 = vmul.f32 1.0, %v1983
        %v1985 = vrcp.pop %v1759
        %v1986 = vmul.f32 %v1759, %v1985
        %v1987 = vsub.f32 1.0, %v1986
        %v1988 = vmul.f32 %v1985, %v1987
        %v1989 = vadd.f32 %v1985, %v1988
        %vm1990 = vweird.f32 %v1759
        %vm1991 = vweird.f32 %v1985
        %vm1992 = vmor %vm1990, %vm1991
        %v1993 = vsel %vm1992, %v1985, %v1989
        %v1994 = vand.u32 2147483647, %v1759
        %vm1995 = vcmp.eq.f32.partialorder %v1994, 8.507059e+37
        %v1996 = vand.u32 %v1759, 2147483648
        %v1997 = vor.u32 1.1754944e-38, %v1996
        %v1998 = vsel %vm1995, %v1997, %v1993
        %v1999 = vmul.f32 1.0, %v1998
        %2000 = vst [vmem:[%s688] sm:$0xff] %v1774
        %2001 = vst [vmem:[%s688 + $0x8] sm:$0xff] %v1789
        %2002 = vst [vmem:[%s688 + $0x10] sm:$0xff] %v1804
        %2003 = vst [vmem:[%s688 + $0x18] sm:$0xff] %v1819
        %2004 = vst [vmem:[%s688 + $0x20] sm:$0xff] %v1834
        %2005 = vst [vmem:[%s688 + $0x28] sm:$0xff] %v1849
        %2006 = vst [vmem:[%s688 + $0x30] sm:$0xff] %v1864
        %2007 = vst [vmem:[%s688 + $0x38] sm:$0xff] %v1879
        %2008 = vst [vmem:[%s688 + $0x40] sm:$0xff] %v1894
        %2009 = vst [vmem:[%s688 + $0x48] sm:$0xff] %v1909
        %2010 = vst [vmem:[%s688 + $0x50] sm:$0xff] %v1924
        %2011 = vst [vmem:[%s688 + $0x58] sm:$0xff] %v1939
        %2012 = vst [vmem:[%s688 + $0x60] sm:$0xff] %v1954
        %2013 = vst [vmem:[%s688 + $0x68] sm:$0xff] %v1969
        %2014 = vst [vmem:[%s688 + $0x70] sm:$0xff] %v1984
        %2015 = vst [vmem:[%s688 + $0x78] sm:$0xff] %v1999
        %s2016 = sand.u32 %s372, 1
        %s2017 = scalar_lea.sflag [#allocation4], %s2016
        %s2018 = sand.u32 %s372, 1
        %s2019 = smul.addr %s2018, 128
        %s2020 = scalar_lea.vmem [#allocation19], %s2019
        // Predicated region
        $region121: #{tpu_custom_call.1} parent=79 // pred_check
          %p2021 = pneg %p382
        $region122: #{tpu_custom_call.1} parent=79 // pred_check_branch
          %2023 = sbr.rel (%p2021) target = $region124
        $region123: #{tpu_custom_call.1} parent=79 // pred_region
          %2025 = vsyncadd %s2017, 0
          %s2026 = smul.addr %s39, 16
          %s2027 = smul.addr %s2026, 8
          %s2028 = scalar_lea.hbm %s15, %s2027
          %s2029 = sshll.u32 %s2020, 4
          %s2030 = int_to_ptr.vmem [resolvable:$true] %s2029
          %s2031 = sshll.u32 %s2028, 4
          %s2032 = int_to_ptr.hbm [resolvable:$true] %s2031
          %2037 = dma.vmem_to_hbm [thread:$0]  %s2030, 2048, %s2032, %s2017, 128, 128, 8
        $region124: #{tpu_custom_call.1} parent=79 // pred_fallthru
          _
      $region80: #{tpu_custom_call.1} parent=5 // pred_fallthru
        _
      %p2038 = scmp.le.s32.totalorder 2, %s34
      // Predicated region
      $region125: #{tpu_custom_call.1} parent=5 // pred_check
        %p2039 = pneg %p2038
      $region126: #{tpu_custom_call.1} parent=5 // pred_check_branch
        %2041 = sbr.rel (%p2039) target = $region128
      $region127: #{tpu_custom_call.1} parent=5 // pred_region
        %s2042 = ssub.s32 %s34, 2
        // Predicated region
        $region129: #{tpu_custom_call.1} parent=127 // pred_check
          %p2043 = pneg %p388
        $region130: #{tpu_custom_call.1} parent=127 // pred_check_branch
          %2045 = sbr.rel (%p2043) target = $region132
        $region131: #{tpu_custom_call.1} parent=127 // pred_region
          %s2046 = sand.u32 %s373, 1
          %s2047 = scalar_lea.sflag [#allocation4], %s2046
          %s2048 = sand.u32 %s373, 1
          %s2049 = smul.addr %s2048, 128
          %s2050 = scalar_lea.vmem [#allocation19], %s2049
          %2052 = dma.done %s2047, 2048
        $region132: #{tpu_custom_call.1} parent=127 // pred_fallthru
          _
      $region128: #{tpu_custom_call.1} parent=5 // pred_fallthru
        _
    $region6: #{tpu_custom_call.1} parent=1 // loop_footer
      %s38 = sadd.s32 1, %s34
    $region7: #{tpu_custom_call.1} parent=1 // loop_footer_branch
      %33 = sbr.rel target = $region3
    $region8: #{tpu_custom_call.1} parent=1 // loop_exit
      _
    %2053 = vsyncpa [#allocation3], 1
    %s2054 = scalar_lea.sflag [#allocation3], 1
    %2055 = vsyncpa %s2054, 1
    %2056 = vsyncpa [#allocation6], 1
    %s2057 = scalar_lea.sflag [#allocation6], 1
    %2058 = vsyncpa %s2057, 1
    %2059 = vsyncpa [#allocation9], 1
    %2060 = vsyncpa [#allocation12], 1
    %2061 = vsyncpa [#allocation15], 1
    %2062 = vsyncpa [#allocation18], 1
    %2063 = vsyncpa [#allocation4], 1
    %s2064 = scalar_lea.sflag [#allocation4], 1
    %2065 = vsyncpa %s2064, 1

</llo_original>
